<compile_context>
chip_gen: v7x
topology: tpu7x:2x2x1
jax: 0.10.0
libtpu: 0.0.40
codegen_flags: <defaults>
</compile_context>

<pallas_src>
import itertools
from functools import lru_cache, partial

import numpy as np
import jax
import jax.numpy as jnp
from jax import lax
from jax.experimental import pallas as pl
from jax.experimental.pallas import tpu as pltpu


# ---------------------------------------------------------------------------
# Deterministic construction of the PGA Cayley table + reverse signs (numpy).
# ---------------------------------------------------------------------------
_METRIC = (0.0, 1.0, 1.0, 1.0)  # e0 degenerate, e1..e3 euclidean
_LANES = 128


def _basis_blades():
    blades = [()]
    for grade in range(1, 5):
        for combo in itertools.combinations(range(4), grade):
            blades.append(combo)
    return blades  # 16 blades, grade-lexicographic


def _blade_mul(a, b):
    lst = list(a) + list(b)
    sign = 1.0
    changed = True
    while changed:  # bubble sort, counting swaps for the sign
        changed = False
        for i in range(len(lst) - 1):
            if lst[i] > lst[i + 1]:
                lst[i], lst[i + 1] = lst[i + 1], lst[i]
                sign = -sign
                changed = True
    out = []
    i = 0
    while i < len(lst):  # contract repeated generators with the metric
        if i + 1 < len(lst) and lst[i] == lst[i + 1]:
            sign *= _METRIC[lst[i]]
            i += 2
        else:
            out.append(lst[i])
            i += 1
    return sign, tuple(out)


@lru_cache(maxsize=None)
def _cayley_and_reverse():
    blades = _basis_blades()
    index = {b: i for i, b in enumerate(blades)}
    cayley = np.zeros((16, 16, 16), dtype=np.float64)  # C[m, j, k]: (a*b)_m
    for j, bj in enumerate(blades):
        for k, bk in enumerate(blades):
            s, res = _blade_mul(bj, bk)
            if s != 0.0:
                cayley[index[res], j, k] = s
    rev = np.array(
        [(-1.0) ** (len(b) * (len(b) - 1) // 2) for b in blades], dtype=np.float64
    )
    return cayley, rev


@lru_cache(maxsize=None)
def _sandwich_terms():
    """Sparse (j, k, sign) term lists for the two geometric products.

    terms_xrev : u_m = sum C[m,j,k]*rev[k] * x_j * T_k    (x * ~T, ~T folded in)
    terms_tu   : y_m = sum C[m,j,k]        * T_j * u_k    (T * u)
    Positive-sign terms are listed first so the accumulator can be seeded
    without a negation; negative terms are emitted as subtractions.
    """
    cayley, rev = _cayley_and_reverse()
    terms_xrev, terms_tu = [], []
    for m in range(16):
        a_terms, b_terms = [], []
        for j in range(16):
            for k in range(16):
                s = cayley[m, j, k]
                if s != 0.0:
                    a_terms.append((j, k, float(s * rev[k])))
                    b_terms.append((j, k, float(s)))
        a_terms.sort(key=lambda t: t[2] < 0.0)
        b_terms.sort(key=lambda t: t[2] < 0.0)
        terms_xrev.append(tuple(a_terms))
        terms_tu.append(tuple(b_terms))
    return tuple(terms_xrev), tuple(terms_tu)


# ---------------------------------------------------------------------------
# Pallas kernel
# ---------------------------------------------------------------------------
def _emit_gp(a, b, terms):
    """Sparse geometric product on per-component slabs (VPU elementwise)."""
    out = []
    for m in range(16):
        tl = terms[m]
        if not tl:
            out.append(jnp.zeros_like(a[0]))
            continue
        j0, k0, s0 = tl[0]
        acc = a[j0] * b[k0]
        if s0 < 0.0:
            acc = -acc
        for j, k, s in tl[1:]:
            p = a[j] * b[k]
            acc = acc + p if s > 0.0 else acc - p
        out.append(acc)
    return out


def _versor_kernel(x_ref, t_ref, o_ref):
    # blocks are (16, TR, 128): component on the leading axis, dense [TR,128]
    # lane-aligned slab per component.
    terms_xrev, terms_tu = _sandwich_terms()
    tr = x_ref.shape[1]

    def process(r0, rows):
        x = [x_ref[c, pl.ds(r0, rows), :] for c in range(16)]  # [rows,128] each
        t = [t_ref[c, pl.ds(r0, rows), :] for c in range(16)]
        u = _emit_gp(x, t, terms_xrev)   # x * reverse(T)   (reverse folded in)
        y = _emit_gp(t, u, terms_tu)     # T * (x * reverse(T))
        for c in range(16):
            o_ref[c, pl.ds(r0, rows), :] = y[c]

    if tr % 8 == 0 and tr > 8:
        # walk 8-row sub-slabs (1 vreg / component) to bound register pressure
        nsteps = tr // 8

        def body(i, carry):
            process(pl.multiple_of(i * 8, 8), 8)
            return carry

        lax.fori_loop(0, nsteps, body, 0)
    else:
        process(0, tr)


def _choose_block_rows(n_rows8, block_rows):
    assert block_rows % 8 == 0 and block_rows >= 8
    if n_rows8 > block_rows:
        return block_rows
    if n_rows8 >= 16:
        # split into >= 2 grid steps so both v7x TensorCores get work
        return ((n_rows8 // 2 + 7) // 8) * 8
    return n_rows8


@partial(jax.jit, static_argnames=("block_rows",))
def ga_versor_forward(x, T, block_rows=64):
    """apply_versor(x, T) = T * x * reverse(T); x, T: (..., 16)."""
    assert x.shape == T.shape and x.shape[-1] == 16
    orig_shape = x.shape
    orig_dtype = x.dtype
    n = int(np.prod(orig_shape[:-1])) if len(orig_shape) > 1 else 1

    xf = x.reshape(n, 16).astype(jnp.float32)
    tf = T.reshape(n, 16).astype(jnp.float32)

    n_rows = -(-n // _LANES)                       # lanes of 128 multivectors
    n_rows8 = max(8, -(-n_rows // 8) * 8)          # sublane-aligned row count
    tr = _choose_block_rows(n_rows8, block_rows)   # rows per grid step
    n_rows_pad = -(-n_rows8 // tr) * tr
    n_pad = n_rows_pad * _LANES

    # TODO(synk): upstream producers/consumers could keep the component-major
    # (16, rows, 128) layout resident and skip these pad/transpose HBM passes.
    def to_comp_major(a):
        a = jnp.pad(a, ((0, n_pad - n), (0, 0)))
        a = a.reshape(n_rows_pad, _LANES, 16)
        return jnp.transpose(a, (2, 0, 1))         # (16, n_rows_pad, 128)

    xcm = to_comp_major(xf)
    tcm = to_comp_major(tf)

    out = pl.pallas_call(
        _versor_kernel,
        out_shape=jax.ShapeDtypeStruct((16, n_rows_pad, _LANES), jnp.float32),
        grid_spec=pltpu.PrefetchScalarGridSpec(
            num_scalar_prefetch=0,
            grid=(n_rows_pad // tr,),
            in_specs=[
                pl.BlockSpec((16, tr, _LANES), lambda i: (0, i, 0)),
                pl.BlockSpec((16, tr, _LANES), lambda i: (0, i, 0)),
            ],
            out_specs=pl.BlockSpec((16, tr, _LANES), lambda i: (0, i, 0)),
        ),
        compiler_params=pltpu.CompilerParams(dimension_semantics=("parallel",)),
    )(xcm, tcm)

    y = jnp.transpose(out, (1, 2, 0)).reshape(n_pad, 16)[:n]
    return y.reshape(orig_shape).astype(orig_dtype)


# ---------------------------------------------------------------------------
# Pure numpy reference (same algebra tables) for a correctness check.
# ---------------------------------------------------------------------------
def _ref_apply_versor(x, T):
    cayley, rev = _cayley_and_reverse()
    xn = np.asarray(x, dtype=np.float64)
    tn = np.asarray(T, dtype=np.float64)
    t_rev = tn * rev
    u = np.einsum("mjk,...j,...k->...m", cayley, xn, t_rev)
    y = np.einsum("mjk,...j,...k->...m", cayley, tn, u)
    return y


if __name__ == "__main__":
    key = jax.random.PRNGKey(0)
    kx, kt = jax.random.split(key)

    # small case (single block)
    x = jax.random.normal(kx, (2, 8, 16), dtype=jnp.float32)
    T = jax.random.normal(kt, (2, 8, 16), dtype=jnp.float32)
    y = jax.block_until_ready(ga_versor_forward(x, T))
    y_ref = _ref_apply_versor(np.asarray(x), np.asarray(T))
    assert y.shape == x.shape
    assert np.allclose(np.asarray(y, dtype=np.float64), y_ref, rtol=1e-4, atol=1e-4)

    # slightly larger case: exercises the multi-block grid + in-kernel row loop
    x2 = jax.random.normal(kx, (3, 1000, 16), dtype=jnp.float32)
    T2 = jax.random.normal(kt, (3, 1000, 16), dtype=jnp.float32)
    y2 = jax.block_until_ready(ga_versor_forward(x2, T2))
    y2_ref = _ref_apply_versor(np.asarray(x2), np.asarray(T2))
    assert np.allclose(np.asarray(y2, dtype=np.float64), y2_ref, rtol=1e-4, atol=1e-4)

    print("KERNEL_OK")
</pallas_src>

<mosaic_0001>
module attributes {stable_mosaic.version = 11 : i64} {
  func.func @_versor_kernel(%arg0: i32, %arg1: memref<16x8x128xf32, #tpu.memory_space<vmem>>, %arg2: memref<16x8x128xf32, #tpu.memory_space<vmem>>, %arg3: memref<16x8x128xf32, #tpu.memory_space<vmem>>) attributes {dimension_semantics = [#tpu.dimension_semantics<parallel>], iteration_bounds = array<i64: 1>, scalar_prefetch = 0 : i64, scratch_operands = 0 : i64, tpu.core_type = #tpu.core_type<tc>, window_params = [{transform_indices = @transform_0, window_bounds = array<i64: 16, 8, 128>}, {transform_indices = @transform_1, window_bounds = array<i64: 16, 8, 128>}, {transform_indices = @transform_2, window_bounds = array<i64: 16, 8, 128>}]} {
    %c0 = arith.constant 0 : index
    %c0_0 = arith.constant 0 : index
    %c0_1 = arith.constant 0 : index
    %0 = vector.load %arg1[%c0, %c0_0, %c0_1] : memref<16x8x128xf32, #tpu.memory_space<vmem>>, vector<1x8x128xf32>
    %1 = vector.shape_cast %0 : vector<1x8x128xf32> to vector<8x128xf32>
    %c1 = arith.constant 1 : index
    %c0_2 = arith.constant 0 : index
    %c0_3 = arith.constant 0 : index
    %2 = vector.load %arg1[%c1, %c0_2, %c0_3] : memref<16x8x128xf32, #tpu.memory_space<vmem>>, vector<1x8x128xf32>
    %3 = vector.shape_cast %2 : vector<1x8x128xf32> to vector<8x128xf32>
    %c2 = arith.constant 2 : index
    %c0_4 = arith.constant 0 : index
    %c0_5 = arith.constant 0 : index
    %4 = vector.load %arg1[%c2, %c0_4, %c0_5] : memref<16x8x128xf32, #tpu.memory_space<vmem>>, vector<1x8x128xf32>
    %5 = vector.shape_cast %4 : vector<1x8x128xf32> to vector<8x128xf32>
    %c3 = arith.constant 3 : index
    %c0_6 = arith.constant 0 : index
    %c0_7 = arith.constant 0 : index
    %6 = vector.load %arg1[%c3, %c0_6, %c0_7] : memref<16x8x128xf32, #tpu.memory_space<vmem>>, vector<1x8x128xf32>
    %7 = vector.shape_cast %6 : vector<1x8x128xf32> to vector<8x128xf32>
    %c4 = arith.constant 4 : index
    %c0_8 = arith.constant 0 : index
    %c0_9 = arith.constant 0 : index
    %8 = vector.load %arg1[%c4, %c0_8, %c0_9] : memref<16x8x128xf32, #tpu.memory_space<vmem>>, vector<1x8x128xf32>
    %9 = vector.shape_cast %8 : vector<1x8x128xf32> to vector<8x128xf32>
    %c5 = arith.constant 5 : index
    %c0_10 = arith.constant 0 : index
    %c0_11 = arith.constant 0 : index
    %10 = vector.load %arg1[%c5, %c0_10, %c0_11] : memref<16x8x128xf32, #tpu.memory_space<vmem>>, vector<1x8x128xf32>
    %11 = vector.shape_cast %10 : vector<1x8x128xf32> to vector<8x128xf32>
    %c6 = arith.constant 6 : index
    %c0_12 = arith.constant 0 : index
    %c0_13 = arith.constant 0 : index
    %12 = vector.load %arg1[%c6, %c0_12, %c0_13] : memref<16x8x128xf32, #tpu.memory_space<vmem>>, vector<1x8x128xf32>
    %13 = vector.shape_cast %12 : vector<1x8x128xf32> to vector<8x128xf32>
    %c7 = arith.constant 7 : index
    %c0_14 = arith.constant 0 : index
    %c0_15 = arith.constant 0 : index
    %14 = vector.load %arg1[%c7, %c0_14, %c0_15] : memref<16x8x128xf32, #tpu.memory_space<vmem>>, vector<1x8x128xf32>
    %15 = vector.shape_cast %14 : vector<1x8x128xf32> to vector<8x128xf32>
    %c8 = arith.constant 8 : index
    %c0_16 = arith.constant 0 : index
    %c0_17 = arith.constant 0 : index
    %16 = vector.load %arg1[%c8, %c0_16, %c0_17] : memref<16x8x128xf32, #tpu.memory_space<vmem>>, vector<1x8x128xf32>
    %17 = vector.shape_cast %16 : vector<1x8x128xf32> to vector<8x128xf32>
    %c9 = arith.constant 9 : index
    %c0_18 = arith.constant 0 : index
    %c0_19 = arith.constant 0 : index
    %18 = vector.load %arg1[%c9, %c0_18, %c0_19] : memref<16x8x128xf32, #tpu.memory_space<vmem>>, vector<1x8x128xf32>
    %19 = vector.shape_cast %18 : vector<1x8x128xf32> to vector<8x128xf32>
    %c10 = arith.constant 10 : index
    %c0_20 = arith.constant 0 : index
    %c0_21 = arith.constant 0 : index
    %20 = vector.load %arg1[%c10, %c0_20, %c0_21] : memref<16x8x128xf32, #tpu.memory_space<vmem>>, vector<1x8x128xf32>
    %21 = vector.shape_cast %20 : vector<1x8x128xf32> to vector<8x128xf32>
    %c11 = arith.constant 11 : index
    %c0_22 = arith.constant 0 : index
    %c0_23 = arith.constant 0 : index
    %22 = vector.load %arg1[%c11, %c0_22, %c0_23] : memref<16x8x128xf32, #tpu.memory_space<vmem>>, vector<1x8x128xf32>
    %23 = vector.shape_cast %22 : vector<1x8x128xf32> to vector<8x128xf32>
    %c12 = arith.constant 12 : index
    %c0_24 = arith.constant 0 : index
    %c0_25 = arith.constant 0 : index
    %24 = vector.load %arg1[%c12, %c0_24, %c0_25] : memref<16x8x128xf32, #tpu.memory_space<vmem>>, vector<1x8x128xf32>
    %25 = vector.shape_cast %24 : vector<1x8x128xf32> to vector<8x128xf32>
    %c13 = arith.constant 13 : index
    %c0_26 = arith.constant 0 : index
    %c0_27 = arith.constant 0 : index
    %26 = vector.load %arg1[%c13, %c0_26, %c0_27] : memref<16x8x128xf32, #tpu.memory_space<vmem>>, vector<1x8x128xf32>
    %27 = vector.shape_cast %26 : vector<1x8x128xf32> to vector<8x128xf32>
    %c14 = arith.constant 14 : index
    %c0_28 = arith.constant 0 : index
    %c0_29 = arith.constant 0 : index
    %28 = vector.load %arg1[%c14, %c0_28, %c0_29] : memref<16x8x128xf32, #tpu.memory_space<vmem>>, vector<1x8x128xf32>
    %29 = vector.shape_cast %28 : vector<1x8x128xf32> to vector<8x128xf32>
    %c15 = arith.constant 15 : index
    %c0_30 = arith.constant 0 : index
    %c0_31 = arith.constant 0 : index
    %30 = vector.load %arg1[%c15, %c0_30, %c0_31] : memref<16x8x128xf32, #tpu.memory_space<vmem>>, vector<1x8x128xf32>
    %31 = vector.shape_cast %30 : vector<1x8x128xf32> to vector<8x128xf32>
    %c0_32 = arith.constant 0 : index
    %c0_33 = arith.constant 0 : index
    %c0_34 = arith.constant 0 : index
    %32 = vector.load %arg2[%c0_32, %c0_33, %c0_34] : memref<16x8x128xf32, #tpu.memory_space<vmem>>, vector<1x8x128xf32>
    %33 = vector.shape_cast %32 : vector<1x8x128xf32> to vector<8x128xf32>
    %c1_35 = arith.constant 1 : index
    %c0_36 = arith.constant 0 : index
    %c0_37 = arith.constant 0 : index
    %34 = vector.load %arg2[%c1_35, %c0_36, %c0_37] : memref<16x8x128xf32, #tpu.memory_space<vmem>>, vector<1x8x128xf32>
    %35 = vector.shape_cast %34 : vector<1x8x128xf32> to vector<8x128xf32>
    %c2_38 = arith.constant 2 : index
    %c0_39 = arith.constant 0 : index
    %c0_40 = arith.constant 0 : index
    %36 = vector.load %arg2[%c2_38, %c0_39, %c0_40] : memref<16x8x128xf32, #tpu.memory_space<vmem>>, vector<1x8x128xf32>
    %37 = vector.shape_cast %36 : vector<1x8x128xf32> to vector<8x128xf32>
    %c3_41 = arith.constant 3 : index
    %c0_42 = arith.constant 0 : index
    %c0_43 = arith.constant 0 : index
    %38 = vector.load %arg2[%c3_41, %c0_42, %c0_43] : memref<16x8x128xf32, #tpu.memory_space<vmem>>, vector<1x8x128xf32>
    %39 = vector.shape_cast %38 : vector<1x8x128xf32> to vector<8x128xf32>
    %c4_44 = arith.constant 4 : index
    %c0_45 = arith.constant 0 : index
    %c0_46 = arith.constant 0 : index
    %40 = vector.load %arg2[%c4_44, %c0_45, %c0_46] : memref<16x8x128xf32, #tpu.memory_space<vmem>>, vector<1x8x128xf32>
    %41 = vector.shape_cast %40 : vector<1x8x128xf32> to vector<8x128xf32>
    %c5_47 = arith.constant 5 : index
    %c0_48 = arith.constant 0 : index
    %c0_49 = arith.constant 0 : index
    %42 = vector.load %arg2[%c5_47, %c0_48, %c0_49] : memref<16x8x128xf32, #tpu.memory_space<vmem>>, vector<1x8x128xf32>
    %43 = vector.shape_cast %42 : vector<1x8x128xf32> to vector<8x128xf32>
    %c6_50 = arith.constant 6 : index
    %c0_51 = arith.constant 0 : index
    %c0_52 = arith.constant 0 : index
    %44 = vector.load %arg2[%c6_50, %c0_51, %c0_52] : memref<16x8x128xf32, #tpu.memory_space<vmem>>, vector<1x8x128xf32>
    %45 = vector.shape_cast %44 : vector<1x8x128xf32> to vector<8x128xf32>
    %c7_53 = arith.constant 7 : index
    %c0_54 = arith.constant 0 : index
    %c0_55 = arith.constant 0 : index
    %46 = vector.load %arg2[%c7_53, %c0_54, %c0_55] : memref<16x8x128xf32, #tpu.memory_space<vmem>>, vector<1x8x128xf32>
    %47 = vector.shape_cast %46 : vector<1x8x128xf32> to vector<8x128xf32>
    %c8_56 = arith.constant 8 : index
    %c0_57 = arith.constant 0 : index
    %c0_58 = arith.constant 0 : index
    %48 = vector.load %arg2[%c8_56, %c0_57, %c0_58] : memref<16x8x128xf32, #tpu.memory_space<vmem>>, vector<1x8x128xf32>
    %49 = vector.shape_cast %48 : vector<1x8x128xf32> to vector<8x128xf32>
    %c9_59 = arith.constant 9 : index
    %c0_60 = arith.constant 0 : index
    %c0_61 = arith.constant 0 : index
    %50 = vector.load %arg2[%c9_59, %c0_60, %c0_61] : memref<16x8x128xf32, #tpu.memory_space<vmem>>, vector<1x8x128xf32>
    %51 = vector.shape_cast %50 : vector<1x8x128xf32> to vector<8x128xf32>
    %c10_62 = arith.constant 10 : index
    %c0_63 = arith.constant 0 : index
    %c0_64 = arith.constant 0 : index
    %52 = vector.load %arg2[%c10_62, %c0_63, %c0_64] : memref<16x8x128xf32, #tpu.memory_space<vmem>>, vector<1x8x128xf32>
    %53 = vector.shape_cast %52 : vector<1x8x128xf32> to vector<8x128xf32>
    %c11_65 = arith.constant 11 : index
    %c0_66 = arith.constant 0 : index
    %c0_67 = arith.constant 0 : index
    %54 = vector.load %arg2[%c11_65, %c0_66, %c0_67] : memref<16x8x128xf32, #tpu.memory_space<vmem>>, vector<1x8x128xf32>
    %55 = vector.shape_cast %54 : vector<1x8x128xf32> to vector<8x128xf32>
    %c12_68 = arith.constant 12 : index
    %c0_69 = arith.constant 0 : index
    %c0_70 = arith.constant 0 : index
    %56 = vector.load %arg2[%c12_68, %c0_69, %c0_70] : memref<16x8x128xf32, #tpu.memory_space<vmem>>, vector<1x8x128xf32>
    %57 = vector.shape_cast %56 : vector<1x8x128xf32> to vector<8x128xf32>
    %c13_71 = arith.constant 13 : index
    %c0_72 = arith.constant 0 : index
    %c0_73 = arith.constant 0 : index
    %58 = vector.load %arg2[%c13_71, %c0_72, %c0_73] : memref<16x8x128xf32, #tpu.memory_space<vmem>>, vector<1x8x128xf32>
    %59 = vector.shape_cast %58 : vector<1x8x128xf32> to vector<8x128xf32>
    %c14_74 = arith.constant 14 : index
    %c0_75 = arith.constant 0 : index
    %c0_76 = arith.constant 0 : index
    %60 = vector.load %arg2[%c14_74, %c0_75, %c0_76] : memref<16x8x128xf32, #tpu.memory_space<vmem>>, vector<1x8x128xf32>
    %61 = vector.shape_cast %60 : vector<1x8x128xf32> to vector<8x128xf32>
    %c15_77 = arith.constant 15 : index
    %c0_78 = arith.constant 0 : index
    %c0_79 = arith.constant 0 : index
    %62 = vector.load %arg2[%c15_77, %c0_78, %c0_79] : memref<16x8x128xf32, #tpu.memory_space<vmem>>, vector<1x8x128xf32>
    %63 = vector.shape_cast %62 : vector<1x8x128xf32> to vector<8x128xf32>
    %64 = arith.mulf %1, %33 : vector<8x128xf32>
    %65 = arith.mulf %5, %37 : vector<8x128xf32>
    %66 = arith.addf %64, %65 : vector<8x128xf32>
    %67 = arith.mulf %7, %39 : vector<8x128xf32>
    %68 = arith.addf %66, %67 : vector<8x128xf32>
    %69 = arith.mulf %9, %41 : vector<8x128xf32>
    %70 = arith.addf %68, %69 : vector<8x128xf32>
    %71 = arith.mulf %17, %49 : vector<8x128xf32>
    %72 = arith.addf %70, %71 : vector<8x128xf32>
    %73 = arith.mulf %19, %51 : vector<8x128xf32>
    %74 = arith.addf %72, %73 : vector<8x128xf32>
    %75 = arith.mulf %21, %53 : vector<8x128xf32>
    %76 = arith.addf %74, %75 : vector<8x128xf32>
    %77 = arith.mulf %29, %61 : vector<8x128xf32>
    %78 = arith.addf %76, %77 : vector<8x128xf32>
    %79 = arith.mulf %1, %35 : vector<8x128xf32>
    %80 = arith.mulf %3, %33 : vector<8x128xf32>
    %81 = arith.addf %79, %80 : vector<8x128xf32>
    %82 = arith.mulf %5, %43 : vector<8x128xf32>
    %83 = arith.addf %81, %82 : vector<8x128xf32>
    %84 = arith.mulf %7, %45 : vector<8x128xf32>
    %85 = arith.addf %83, %84 : vector<8x128xf32>
    %86 = arith.mulf %9, %47 : vector<8x128xf32>
    %87 = arith.addf %85, %86 : vector<8x128xf32>
    %88 = arith.mulf %11, %37 : vector<8x128xf32>
    %89 = arith.addf %87, %88 : vector<8x128xf32>
    %90 = arith.mulf %13, %39 : vector<8x128xf32>
    %91 = arith.addf %89, %90 : vector<8x128xf32>
    %92 = arith.mulf %15, %41 : vector<8x128xf32>
    %93 = arith.addf %91, %92 : vector<8x128xf32>
    %94 = arith.mulf %17, %55 : vector<8x128xf32>
    %95 = arith.addf %93, %94 : vector<8x128xf32>
    %96 = arith.mulf %19, %57 : vector<8x128xf32>
    %97 = arith.addf %95, %96 : vector<8x128xf32>
    %98 = arith.mulf %21, %59 : vector<8x128xf32>
    %99 = arith.addf %97, %98 : vector<8x128xf32>
    %100 = arith.mulf %23, %49 : vector<8x128xf32>
    %101 = arith.addf %99, %100 : vector<8x128xf32>
    %102 = arith.mulf %25, %51 : vector<8x128xf32>
    %103 = arith.addf %101, %102 : vector<8x128xf32>
    %104 = arith.mulf %27, %53 : vector<8x128xf32>
    %105 = arith.addf %103, %104 : vector<8x128xf32>
    %106 = arith.mulf %29, %63 : vector<8x128xf32>
    %107 = arith.addf %105, %106 : vector<8x128xf32>
    %108 = arith.mulf %31, %61 : vector<8x128xf32>
    %109 = arith.addf %107, %108 : vector<8x128xf32>
    %110 = arith.mulf %1, %37 : vector<8x128xf32>
    %111 = arith.mulf %5, %33 : vector<8x128xf32>
    %112 = arith.addf %110, %111 : vector<8x128xf32>
    %113 = arith.mulf %7, %49 : vector<8x128xf32>
    %114 = arith.addf %112, %113 : vector<8x128xf32>
    %115 = arith.mulf %9, %51 : vector<8x128xf32>
    %116 = arith.addf %114, %115 : vector<8x128xf32>
    %117 = arith.mulf %17, %39 : vector<8x128xf32>
    %118 = arith.addf %116, %117 : vector<8x128xf32>
    %119 = arith.mulf %19, %41 : vector<8x128xf32>
    %120 = arith.addf %118, %119 : vector<8x128xf32>
    %121 = arith.mulf %21, %61 : vector<8x128xf32>
    %122 = arith.addf %120, %121 : vector<8x128xf32>
    %123 = arith.mulf %29, %53 : vector<8x128xf32>
    %124 = arith.addf %122, %123 : vector<8x128xf32>
    %125 = arith.mulf %1, %39 : vector<8x128xf32>
    %126 = arith.mulf %7, %33 : vector<8x128xf32>
    %127 = arith.addf %125, %126 : vector<8x128xf32>
    %128 = arith.mulf %9, %53 : vector<8x128xf32>
    %129 = arith.addf %127, %128 : vector<8x128xf32>
    %130 = arith.mulf %21, %41 : vector<8x128xf32>
    %131 = arith.addf %129, %130 : vector<8x128xf32>
    %132 = arith.mulf %5, %49 : vector<8x128xf32>
    %133 = arith.subf %131, %132 : vector<8x128xf32>
    %134 = arith.mulf %17, %37 : vector<8x128xf32>
    %135 = arith.subf %133, %134 : vector<8x128xf32>
    %136 = arith.mulf %19, %61 : vector<8x128xf32>
    %137 = arith.subf %135, %136 : vector<8x128xf32>
    %138 = arith.mulf %29, %51 : vector<8x128xf32>
    %139 = arith.subf %137, %138 : vector<8x128xf32>
    %140 = arith.mulf %1, %41 : vector<8x128xf32>
    %141 = arith.mulf %9, %33 : vector<8x128xf32>
    %142 = arith.addf %140, %141 : vector<8x128xf32>
    %143 = arith.mulf %17, %61 : vector<8x128xf32>
    %144 = arith.addf %142, %143 : vector<8x128xf32>
    %145 = arith.mulf %29, %49 : vector<8x128xf32>
    %146 = arith.addf %144, %145 : vector<8x128xf32>
    %147 = arith.mulf %5, %51 : vector<8x128xf32>
    %148 = arith.subf %146, %147 : vector<8x128xf32>
    %149 = arith.mulf %7, %53 : vector<8x128xf32>
    %150 = arith.subf %148, %149 : vector<8x128xf32>
    %151 = arith.mulf %19, %37 : vector<8x128xf32>
    %152 = arith.subf %150, %151 : vector<8x128xf32>
    %153 = arith.mulf %21, %39 : vector<8x128xf32>
    %154 = arith.subf %152, %153 : vector<8x128xf32>
    %155 = arith.mulf %3, %37 : vector<8x128xf32>
    %156 = arith.mulf %11, %33 : vector<8x128xf32>
    %157 = arith.addf %155, %156 : vector<8x128xf32>
    %158 = arith.mulf %13, %49 : vector<8x128xf32>
    %159 = arith.addf %157, %158 : vector<8x128xf32>
    %160 = arith.mulf %15, %51 : vector<8x128xf32>
    %161 = arith.addf %159, %160 : vector<8x128xf32>
    %162 = arith.mulf %23, %39 : vector<8x128xf32>
    %163 = arith.addf %161, %162 : vector<8x128xf32>
    %164 = arith.mulf %25, %41 : vector<8x128xf32>
    %165 = arith.addf %163, %164 : vector<8x128xf32>
    %166 = arith.mulf %27, %61 : vector<8x128xf32>
    %167 = arith.addf %165, %166 : vector<8x128xf32>
    %168 = arith.mulf %31, %53 : vector<8x128xf32>
    %169 = arith.addf %167, %168 : vector<8x128xf32>
    %170 = arith.mulf %1, %43 : vector<8x128xf32>
    %171 = arith.subf %169, %170 : vector<8x128xf32>
    %172 = arith.mulf %5, %35 : vector<8x128xf32>
    %173 = arith.subf %171, %172 : vector<8x128xf32>
    %174 = arith.mulf %7, %55 : vector<8x128xf32>
    %175 = arith.subf %173, %174 : vector<8x128xf32>
    %176 = arith.mulf %9, %57 : vector<8x128xf32>
    %177 = arith.subf %175, %176 : vector<8x128xf32>
    %178 = arith.mulf %17, %45 : vector<8x128xf32>
    %179 = arith.subf %177, %178 : vector<8x128xf32>
    %180 = arith.mulf %19, %47 : vector<8x128xf32>
    %181 = arith.subf %179, %180 : vector<8x128xf32>
    %182 = arith.mulf %21, %63 : vector<8x128xf32>
    %183 = arith.subf %181, %182 : vector<8x128xf32>
    %184 = arith.mulf %29, %59 : vector<8x128xf32>
    %185 = arith.subf %183, %184 : vector<8x128xf32>
    %186 = arith.mulf %3, %39 : vector<8x128xf32>
    %187 = arith.mulf %5, %55 : vector<8x128xf32>
    %188 = arith.addf %186, %187 : vector<8x128xf32>
    %189 = arith.mulf %13, %33 : vector<8x128xf32>
    %190 = arith.addf %188, %189 : vector<8x128xf32>
    %191 = arith.mulf %15, %53 : vector<8x128xf32>
    %192 = arith.addf %190, %191 : vector<8x128xf32>
    %193 = arith.mulf %17, %43 : vector<8x128xf32>
    %194 = arith.addf %192, %193 : vector<8x128xf32>
    %195 = arith.mulf %19, %63 : vector<8x128xf32>
    %196 = arith.addf %194, %195 : vector<8x128xf32>
    %197 = arith.mulf %27, %41 : vector<8x128xf32>
    %198 = arith.addf %196, %197 : vector<8x128xf32>
    %199 = arith.mulf %29, %57 : vector<8x128xf32>
    %200 = arith.addf %198, %199 : vector<8x128xf32>
    %201 = arith.mulf %1, %45 : vector<8x128xf32>
    %202 = arith.subf %200, %201 : vector<8x128xf32>
    %203 = arith.mulf %7, %35 : vector<8x128xf32>
    %204 = arith.subf %202, %203 : vector<8x128xf32>
    %205 = arith.mulf %9, %59 : vector<8x128xf32>
    %206 = arith.subf %204, %205 : vector<8x128xf32>
    %207 = arith.mulf %11, %49 : vector<8x128xf32>
    %208 = arith.subf %206, %207 : vector<8x128xf32>
    %209 = arith.mulf %21, %47 : vector<8x128xf32>
    %210 = arith.subf %208, %209 : vector<8x128xf32>
    %211 = arith.mulf %23, %37 : vector<8x128xf32>
    %212 = arith.subf %210, %211 : vector<8x128xf32>
    %213 = arith.mulf %25, %61 : vector<8x128xf32>
    %214 = arith.subf %212, %213 : vector<8x128xf32>
    %215 = arith.mulf %31, %51 : vector<8x128xf32>
    %216 = arith.subf %214, %215 : vector<8x128xf32>
    %217 = arith.mulf %3, %41 : vector<8x128xf32>
    %218 = arith.mulf %5, %57 : vector<8x128xf32>
    %219 = arith.addf %217, %218 : vector<8x128xf32>
    %220 = arith.mulf %7, %59 : vector<8x128xf32>
    %221 = arith.addf %219, %220 : vector<8x128xf32>
    %222 = arith.mulf %15, %33 : vector<8x128xf32>
    %223 = arith.addf %221, %222 : vector<8x128xf32>
    %224 = arith.mulf %19, %43 : vector<8x128xf32>
    %225 = arith.addf %223, %224 : vector<8x128xf32>
    %226 = arith.mulf %21, %45 : vector<8x128xf32>
    %227 = arith.addf %225, %226 : vector<8x128xf32>
    %228 = arith.mulf %23, %61 : vector<8x128xf32>
    %229 = arith.addf %227, %228 : vector<8x128xf32>
    %230 = arith.mulf %31, %49 : vector<8x128xf32>
    %231 = arith.addf %229, %230 : vector<8x128xf32>
    %232 = arith.mulf %1, %47 : vector<8x128xf32>
    %233 = arith.subf %231, %232 : vector<8x128xf32>
    %234 = arith.mulf %9, %35 : vector<8x128xf32>
    %235 = arith.subf %233, %234 : vector<8x128xf32>
    %236 = arith.mulf %11, %51 : vector<8x128xf32>
    %237 = arith.subf %235, %236 : vector<8x128xf32>
    %238 = arith.mulf %13, %53 : vector<8x128xf32>
    %239 = arith.subf %237, %238 : vector<8x128xf32>
    %240 = arith.mulf %17, %63 : vector<8x128xf32>
    %241 = arith.subf %239, %240 : vector<8x128xf32>
    %242 = arith.mulf %25, %37 : vector<8x128xf32>
    %243 = arith.subf %241, %242 : vector<8x128xf32>
    %244 = arith.mulf %27, %39 : vector<8x128xf32>
    %245 = arith.subf %243, %244 : vector<8x128xf32>
    %246 = arith.mulf %29, %55 : vector<8x128xf32>
    %247 = arith.subf %245, %246 : vector<8x128xf32>
    %248 = arith.mulf %5, %39 : vector<8x128xf32>
    %249 = arith.mulf %17, %33 : vector<8x128xf32>
    %250 = arith.addf %248, %249 : vector<8x128xf32>
    %251 = arith.mulf %19, %53 : vector<8x128xf32>
    %252 = arith.addf %250, %251 : vector<8x128xf32>
    %253 = arith.mulf %29, %41 : vector<8x128xf32>
    %254 = arith.addf %252, %253 : vector<8x128xf32>
    %255 = arith.mulf %1, %49 : vector<8x128xf32>
    %256 = arith.subf %254, %255 : vector<8x128xf32>
    %257 = arith.mulf %7, %37 : vector<8x128xf32>
    %258 = arith.subf %256, %257 : vector<8x128xf32>
    %259 = arith.mulf %9, %61 : vector<8x128xf32>
    %260 = arith.subf %258, %259 : vector<8x128xf32>
    %261 = arith.mulf %21, %51 : vector<8x128xf32>
    %262 = arith.subf %260, %261 : vector<8x128xf32>
    %263 = arith.mulf %5, %41 : vector<8x128xf32>
    %264 = arith.mulf %7, %61 : vector<8x128xf32>
    %265 = arith.addf %263, %264 : vector<8x128xf32>
    %266 = arith.mulf %19, %33 : vector<8x128xf32>
    %267 = arith.addf %265, %266 : vector<8x128xf32>
    %268 = arith.mulf %21, %49 : vector<8x128xf32>
    %269 = arith.addf %267, %268 : vector<8x128xf32>
    %270 = arith.mulf %1, %51 : vector<8x128xf32>
    %271 = arith.subf %269, %270 : vector<8x128xf32>
    %272 = arith.mulf %9, %37 : vector<8x128xf32>
    %273 = arith.subf %271, %272 : vector<8x128xf32>
    %274 = arith.mulf %17, %53 : vector<8x128xf32>
    %275 = arith.subf %273, %274 : vector<8x128xf32>
    %276 = arith.mulf %29, %39 : vector<8x128xf32>
    %277 = arith.subf %275, %276 : vector<8x128xf32>
    %278 = arith.mulf %7, %41 : vector<8x128xf32>
    %279 = arith.mulf %17, %51 : vector<8x128xf32>
    %280 = arith.addf %278, %279 : vector<8x128xf32>
    %281 = arith.mulf %21, %33 : vector<8x128xf32>
    %282 = arith.addf %280, %281 : vector<8x128xf32>
    %283 = arith.mulf %29, %37 : vector<8x128xf32>
    %284 = arith.addf %282, %283 : vector<8x128xf32>
    %285 = arith.mulf %1, %53 : vector<8x128xf32>
    %286 = arith.subf %284, %285 : vector<8x128xf32>
    %287 = arith.mulf %5, %61 : vector<8x128xf32>
    %288 = arith.subf %286, %287 : vector<8x128xf32>
    %289 = arith.mulf %9, %39 : vector<8x128xf32>
    %290 = arith.subf %288, %289 : vector<8x128xf32>
    %291 = arith.mulf %19, %49 : vector<8x128xf32>
    %292 = arith.subf %290, %291 : vector<8x128xf32>
    %293 = arith.mulf %5, %45 : vector<8x128xf32>
    %294 = arith.mulf %11, %39 : vector<8x128xf32>
    %295 = arith.addf %293, %294 : vector<8x128xf32>
    %296 = arith.mulf %17, %35 : vector<8x128xf32>
    %297 = arith.addf %295, %296 : vector<8x128xf32>
    %298 = arith.mulf %19, %59 : vector<8x128xf32>
    %299 = arith.addf %297, %298 : vector<8x128xf32>
    %300 = arith.mulf %23, %33 : vector<8x128xf32>
    %301 = arith.addf %299, %300 : vector<8x128xf32>
    %302 = arith.mulf %25, %53 : vector<8x128xf32>
    %303 = arith.addf %301, %302 : vector<8x128xf32>
    %304 = arith.mulf %29, %47 : vector<8x128xf32>
    %305 = arith.addf %303, %304 : vector<8x128xf32>
    %306 = arith.mulf %31, %41 : vector<8x128xf32>
    %307 = arith.addf %305, %306 : vector<8x128xf32>
    %308 = arith.mulf %1, %55 : vector<8x128xf32>
    %309 = arith.subf %307, %308 : vector<8x128xf32>
    %310 = arith.mulf %3, %49 : vector<8x128xf32>
    %311 = arith.subf %309, %310 : vector<8x128xf32>
    %312 = arith.mulf %7, %43 : vector<8x128xf32>
    %313 = arith.subf %311, %312 : vector<8x128xf32>
    %314 = arith.mulf %9, %63 : vector<8x128xf32>
    %315 = arith.subf %313, %314 : vector<8x128xf32>
    %316 = arith.mulf %13, %37 : vector<8x128xf32>
    %317 = arith.subf %315, %316 : vector<8x128xf32>
    %318 = arith.mulf %15, %61 : vector<8x128xf32>
    %319 = arith.subf %317, %318 : vector<8x128xf32>
    %320 = arith.mulf %21, %57 : vector<8x128xf32>
    %321 = arith.subf %319, %320 : vector<8x128xf32>
    %322 = arith.mulf %27, %51 : vector<8x128xf32>
    %323 = arith.subf %321, %322 : vector<8x128xf32>
    %324 = arith.mulf %5, %47 : vector<8x128xf32>
    %325 = arith.mulf %7, %63 : vector<8x128xf32>
    %326 = arith.addf %324, %325 : vector<8x128xf32>
    %327 = arith.mulf %11, %41 : vector<8x128xf32>
    %328 = arith.addf %326, %327 : vector<8x128xf32>
    %329 = arith.mulf %13, %61 : vector<8x128xf32>
    %330 = arith.addf %328, %329 : vector<8x128xf32>
    %331 = arith.mulf %19, %35 : vector<8x128xf32>
    %332 = arith.addf %330, %331 : vector<8x128xf32>
    %333 = arith.mulf %21, %55 : vector<8x128xf32>
    %334 = arith.addf %332, %333 : vector<8x128xf32>
    %335 = arith.mulf %25, %33 : vector<8x128xf32>
    %336 = arith.addf %334, %335 : vector<8x128xf32>
    %337 = arith.mulf %27, %49 : vector<8x128xf32>
    %338 = arith.addf %336, %337 : vector<8x128xf32>
    %339 = arith.mulf %1, %57 : vector<8x128xf32>
    %340 = arith.subf %338, %339 : vector<8x128xf32>
    %341 = arith.mulf %3, %51 : vector<8x128xf32>
    %342 = arith.subf %340, %341 : vector<8x128xf32>
    %343 = arith.mulf %9, %43 : vector<8x128xf32>
    %344 = arith.subf %342, %343 : vector<8x128xf32>
    %345 = arith.mulf %15, %37 : vector<8x128xf32>
    %346 = arith.subf %344, %345 : vector<8x128xf32>
    %347 = arith.mulf %17, %59 : vector<8x128xf32>
    %348 = arith.subf %346, %347 : vector<8x128xf32>
    %349 = arith.mulf %23, %53 : vector<8x128xf32>
    %350 = arith.subf %348, %349 : vector<8x128xf32>
    %351 = arith.mulf %29, %45 : vector<8x128xf32>
    %352 = arith.subf %350, %351 : vector<8x128xf32>
    %353 = arith.mulf %31, %39 : vector<8x128xf32>
    %354 = arith.subf %352, %353 : vector<8x128xf32>
    %355 = arith.mulf %7, %47 : vector<8x128xf32>
    %356 = arith.mulf %13, %41 : vector<8x128xf32>
    %357 = arith.addf %355, %356 : vector<8x128xf32>
    %358 = arith.mulf %17, %57 : vector<8x128xf32>
    %359 = arith.addf %357, %358 : vector<8x128xf32>
    %360 = arith.mulf %21, %35 : vector<8x128xf32>
    %361 = arith.addf %359, %360 : vector<8x128xf32>
    %362 = arith.mulf %23, %51 : vector<8x128xf32>
    %363 = arith.addf %361, %362 : vector<8x128xf32>
    %364 = arith.mulf %27, %33 : vector<8x128xf32>
    %365 = arith.addf %363, %364 : vector<8x128xf32>
    %366 = arith.mulf %29, %43 : vector<8x128xf32>
    %367 = arith.addf %365, %366 : vector<8x128xf32>
    %368 = arith.mulf %31, %37 : vector<8x128xf32>
    %369 = arith.addf %367, %368 : vector<8x128xf32>
    %370 = arith.mulf %1, %59 : vector<8x128xf32>
    %371 = arith.subf %369, %370 : vector<8x128xf32>
    %372 = arith.mulf %3, %53 : vector<8x128xf32>
    %373 = arith.subf %371, %372 : vector<8x128xf32>
    %374 = arith.mulf %5, %63 : vector<8x128xf32>
    %375 = arith.subf %373, %374 : vector<8x128xf32>
    %376 = arith.mulf %9, %45 : vector<8x128xf32>
    %377 = arith.subf %375, %376 : vector<8x128xf32>
    %378 = arith.mulf %11, %61 : vector<8x128xf32>
    %379 = arith.subf %377, %378 : vector<8x128xf32>
    %380 = arith.mulf %15, %39 : vector<8x128xf32>
    %381 = arith.subf %379, %380 : vector<8x128xf32>
    %382 = arith.mulf %19, %55 : vector<8x128xf32>
    %383 = arith.subf %381, %382 : vector<8x128xf32>
    %384 = arith.mulf %25, %49 : vector<8x128xf32>
    %385 = arith.subf %383, %384 : vector<8x128xf32>
    %386 = arith.mulf %7, %51 : vector<8x128xf32>
    %387 = arith.mulf %17, %41 : vector<8x128xf32>
    %388 = arith.addf %386, %387 : vector<8x128xf32>
    %389 = arith.mulf %21, %37 : vector<8x128xf32>
    %390 = arith.addf %388, %389 : vector<8x128xf32>
    %391 = arith.mulf %29, %33 : vector<8x128xf32>
    %392 = arith.addf %390, %391 : vector<8x128xf32>
    %393 = arith.mulf %1, %61 : vector<8x128xf32>
    %394 = arith.subf %392, %393 : vector<8x128xf32>
    %395 = arith.mulf %5, %53 : vector<8x128xf32>
    %396 = arith.subf %394, %395 : vector<8x128xf32>
    %397 = arith.mulf %9, %49 : vector<8x128xf32>
    %398 = arith.subf %396, %397 : vector<8x128xf32>
    %399 = arith.mulf %19, %39 : vector<8x128xf32>
    %400 = arith.subf %398, %399 : vector<8x128xf32>
    %401 = arith.mulf %1, %63 : vector<8x128xf32>
    %402 = arith.mulf %5, %59 : vector<8x128xf32>
    %403 = arith.addf %401, %402 : vector<8x128xf32>
    %404 = arith.mulf %9, %55 : vector<8x128xf32>
    %405 = arith.addf %403, %404 : vector<8x128xf32>
    %406 = arith.mulf %13, %51 : vector<8x128xf32>
    %407 = arith.addf %405, %406 : vector<8x128xf32>
    %408 = arith.mulf %19, %45 : vector<8x128xf32>
    %409 = arith.addf %407, %408 : vector<8x128xf32>
    %410 = arith.mulf %23, %41 : vector<8x128xf32>
    %411 = arith.addf %409, %410 : vector<8x128xf32>
    %412 = arith.mulf %27, %37 : vector<8x128xf32>
    %413 = arith.addf %411, %412 : vector<8x128xf32>
    %414 = arith.mulf %31, %33 : vector<8x128xf32>
    %415 = arith.addf %413, %414 : vector<8x128xf32>
    %416 = arith.mulf %3, %61 : vector<8x128xf32>
    %417 = arith.subf %415, %416 : vector<8x128xf32>
    %418 = arith.mulf %7, %57 : vector<8x128xf32>
    %419 = arith.subf %417, %418 : vector<8x128xf32>
    %420 = arith.mulf %11, %53 : vector<8x128xf32>
    %421 = arith.subf %419, %420 : vector<8x128xf32>
    %422 = arith.mulf %15, %49 : vector<8x128xf32>
    %423 = arith.subf %421, %422 : vector<8x128xf32>
    %424 = arith.mulf %17, %47 : vector<8x128xf32>
    %425 = arith.subf %423, %424 : vector<8x128xf32>
    %426 = arith.mulf %21, %43 : vector<8x128xf32>
    %427 = arith.subf %425, %426 : vector<8x128xf32>
    %428 = arith.mulf %25, %39 : vector<8x128xf32>
    %429 = arith.subf %427, %428 : vector<8x128xf32>
    %430 = arith.mulf %29, %35 : vector<8x128xf32>
    %431 = arith.subf %429, %430 : vector<8x128xf32>
    %432 = arith.mulf %33, %78 : vector<8x128xf32>
    %433 = arith.mulf %37, %124 : vector<8x128xf32>
    %434 = arith.addf %432, %433 : vector<8x128xf32>
    %435 = arith.mulf %39, %139 : vector<8x128xf32>
    %436 = arith.addf %434, %435 : vector<8x128xf32>
    %437 = arith.mulf %41, %154 : vector<8x128xf32>
    %438 = arith.addf %436, %437 : vector<8x128xf32>
    %439 = arith.mulf %49, %262 : vector<8x128xf32>
    %440 = arith.subf %438, %439 : vector<8x128xf32>
    %441 = arith.mulf %51, %277 : vector<8x128xf32>
    %442 = arith.subf %440, %441 : vector<8x128xf32>
    %443 = arith.mulf %53, %292 : vector<8x128xf32>
    %444 = arith.subf %442, %443 : vector<8x128xf32>
    %445 = arith.mulf %61, %400 : vector<8x128xf32>
    %446 = arith.subf %444, %445 : vector<8x128xf32>
    %447 = arith.mulf %33, %109 : vector<8x128xf32>
    %448 = arith.mulf %35, %78 : vector<8x128xf32>
    %449 = arith.addf %447, %448 : vector<8x128xf32>
    %450 = arith.mulf %43, %124 : vector<8x128xf32>
    %451 = arith.addf %449, %450 : vector<8x128xf32>
    %452 = arith.mulf %45, %139 : vector<8x128xf32>
    %453 = arith.addf %451, %452 : vector<8x128xf32>
    %454 = arith.mulf %47, %154 : vector<8x128xf32>
    %455 = arith.addf %453, %454 : vector<8x128xf32>
    %456 = arith.mulf %61, %431 : vector<8x128xf32>
    %457 = arith.addf %455, %456 : vector<8x128xf32>
    %458 = arith.mulf %37, %185 : vector<8x128xf32>
    %459 = arith.subf %457, %458 : vector<8x128xf32>
    %460 = arith.mulf %39, %216 : vector<8x128xf32>
    %461 = arith.subf %459, %460 : vector<8x128xf32>
    %462 = arith.mulf %41, %247 : vector<8x128xf32>
    %463 = arith.subf %461, %462 : vector<8x128xf32>
    %464 = arith.mulf %49, %323 : vector<8x128xf32>
    %465 = arith.subf %463, %464 : vector<8x128xf32>
    %466 = arith.mulf %51, %354 : vector<8x128xf32>
    %467 = arith.subf %465, %466 : vector<8x128xf32>
    %468 = arith.mulf %53, %385 : vector<8x128xf32>
    %469 = arith.subf %467, %468 : vector<8x128xf32>
    %470 = arith.mulf %55, %262 : vector<8x128xf32>
    %471 = arith.subf %469, %470 : vector<8x128xf32>
    %472 = arith.mulf %57, %277 : vector<8x128xf32>
    %473 = arith.subf %471, %472 : vector<8x128xf32>
    %474 = arith.mulf %59, %292 : vector<8x128xf32>
    %475 = arith.subf %473, %474 : vector<8x128xf32>
    %476 = arith.mulf %63, %400 : vector<8x128xf32>
    %477 = arith.subf %475, %476 : vector<8x128xf32>
    %478 = arith.mulf %33, %124 : vector<8x128xf32>
    %479 = arith.mulf %37, %78 : vector<8x128xf32>
    %480 = arith.addf %478, %479 : vector<8x128xf32>
    %481 = arith.mulf %49, %139 : vector<8x128xf32>
    %482 = arith.addf %480, %481 : vector<8x128xf32>
    %483 = arith.mulf %51, %154 : vector<8x128xf32>
    %484 = arith.addf %482, %483 : vector<8x128xf32>
    %485 = arith.mulf %39, %262 : vector<8x128xf32>
    %486 = arith.subf %484, %485 : vector<8x128xf32>
    %487 = arith.mulf %41, %277 : vector<8x128xf32>
    %488 = arith.subf %486, %487 : vector<8x128xf32>
    %489 = arith.mulf %53, %400 : vector<8x128xf32>
    %490 = arith.subf %488, %489 : vector<8x128xf32>
    %491 = arith.mulf %61, %292 : vector<8x128xf32>
    %492 = arith.subf %490, %491 : vector<8x128xf32>
    %493 = arith.mulf %33, %139 : vector<8x128xf32>
    %494 = arith.mulf %37, %262 : vector<8x128xf32>
    %495 = arith.addf %493, %494 : vector<8x128xf32>
    %496 = arith.mulf %39, %78 : vector<8x128xf32>
    %497 = arith.addf %495, %496 : vector<8x128xf32>
    %498 = arith.mulf %51, %400 : vector<8x128xf32>
    %499 = arith.addf %497, %498 : vector<8x128xf32>
    %500 = arith.mulf %53, %154 : vector<8x128xf32>
    %501 = arith.addf %499, %500 : vector<8x128xf32>
    %502 = arith.mulf %61, %277 : vector<8x128xf32>
    %503 = arith.addf %501, %502 : vector<8x128xf32>
    %504 = arith.mulf %41, %292 : vector<8x128xf32>
    %505 = arith.subf %503, %504 : vector<8x128xf32>
    %506 = arith.mulf %49, %124 : vector<8x128xf32>
    %507 = arith.subf %505, %506 : vector<8x128xf32>
    %508 = arith.mulf %33, %154 : vector<8x128xf32>
    %509 = arith.mulf %37, %277 : vector<8x128xf32>
    %510 = arith.addf %508, %509 : vector<8x128xf32>
    %511 = arith.mulf %39, %292 : vector<8x128xf32>
    %512 = arith.addf %510, %511 : vector<8x128xf32>
    %513 = arith.mulf %41, %78 : vector<8x128xf32>
    %514 = arith.addf %512, %513 : vector<8x128xf32>
    %515 = arith.mulf %49, %400 : vector<8x128xf32>
    %516 = arith.subf %514, %515 : vector<8x128xf32>
    %517 = arith.mulf %51, %124 : vector<8x128xf32>
    %518 = arith.subf %516, %517 : vector<8x128xf32>
    %519 = arith.mulf %53, %139 : vector<8x128xf32>
    %520 = arith.subf %518, %519 : vector<8x128xf32>
    %521 = arith.mulf %61, %262 : vector<8x128xf32>
    %522 = arith.subf %520, %521 : vector<8x128xf32>
    %523 = arith.mulf %33, %185 : vector<8x128xf32>
    %524 = arith.mulf %35, %124 : vector<8x128xf32>
    %525 = arith.addf %523, %524 : vector<8x128xf32>
    %526 = arith.mulf %39, %323 : vector<8x128xf32>
    %527 = arith.addf %525, %526 : vector<8x128xf32>
    %528 = arith.mulf %41, %354 : vector<8x128xf32>
    %529 = arith.addf %527, %528 : vector<8x128xf32>
    %530 = arith.mulf %43, %78 : vector<8x128xf32>
    %531 = arith.addf %529, %530 : vector<8x128xf32>
    %532 = arith.mulf %49, %216 : vector<8x128xf32>
    %533 = arith.addf %531, %532 : vector<8x128xf32>
    %534 = arith.mulf %51, %247 : vector<8x128xf32>
    %535 = arith.addf %533, %534 : vector<8x128xf32>
    %536 = arith.mulf %55, %139 : vector<8x128xf32>
    %537 = arith.addf %535, %536 : vector<8x128xf32>
    %538 = arith.mulf %57, %154 : vector<8x128xf32>
    %539 = arith.addf %537, %538 : vector<8x128xf32>
    %540 = arith.mulf %61, %385 : vector<8x128xf32>
    %541 = arith.addf %539, %540 : vector<8x128xf32>
    %542 = arith.mulf %37, %109 : vector<8x128xf32>
    %543 = arith.subf %541, %542 : vector<8x128xf32>
    %544 = arith.mulf %45, %262 : vector<8x128xf32>
    %545 = arith.subf %543, %544 : vector<8x128xf32>
    %546 = arith.mulf %47, %277 : vector<8x128xf32>
    %547 = arith.subf %545, %546 : vector<8x128xf32>
    %548 = arith.mulf %53, %431 : vector<8x128xf32>
    %549 = arith.subf %547, %548 : vector<8x128xf32>
    %550 = arith.mulf %59, %400 : vector<8x128xf32>
    %551 = arith.subf %549, %550 : vector<8x128xf32>
    %552 = arith.mulf %63, %292 : vector<8x128xf32>
    %553 = arith.subf %551, %552 : vector<8x128xf32>
    %554 = arith.mulf %33, %216 : vector<8x128xf32>
    %555 = arith.mulf %35, %139 : vector<8x128xf32>
    %556 = arith.addf %554, %555 : vector<8x128xf32>
    %557 = arith.mulf %41, %385 : vector<8x128xf32>
    %558 = arith.addf %556, %557 : vector<8x128xf32>
    %559 = arith.mulf %43, %262 : vector<8x128xf32>
    %560 = arith.addf %558, %559 : vector<8x128xf32>
    %561 = arith.mulf %45, %78 : vector<8x128xf32>
    %562 = arith.addf %560, %561 : vector<8x128xf32>
    %563 = arith.mulf %51, %431 : vector<8x128xf32>
    %564 = arith.addf %562, %563 : vector<8x128xf32>
    %565 = arith.mulf %53, %247 : vector<8x128xf32>
    %566 = arith.addf %564, %565 : vector<8x128xf32>
    %567 = arith.mulf %57, %400 : vector<8x128xf32>
    %568 = arith.addf %566, %567 : vector<8x128xf32>
    %569 = arith.mulf %59, %154 : vector<8x128xf32>
    %570 = arith.addf %568, %569 : vector<8x128xf32>
    %571 = arith.mulf %63, %277 : vector<8x128xf32>
    %572 = arith.addf %570, %571 : vector<8x128xf32>
    %573 = arith.mulf %37, %323 : vector<8x128xf32>
    %574 = arith.subf %572, %573 : vector<8x128xf32>
    %575 = arith.mulf %39, %109 : vector<8x128xf32>
    %576 = arith.subf %574, %575 : vector<8x128xf32>
    %577 = arith.mulf %47, %292 : vector<8x128xf32>
    %578 = arith.subf %576, %577 : vector<8x128xf32>
    %579 = arith.mulf %49, %185 : vector<8x128xf32>
    %580 = arith.subf %578, %579 : vector<8x128xf32>
    %581 = arith.mulf %55, %124 : vector<8x128xf32>
    %582 = arith.subf %580, %581 : vector<8x128xf32>
    %583 = arith.mulf %61, %354 : vector<8x128xf32>
    %584 = arith.subf %582, %583 : vector<8x128xf32>
    %585 = arith.mulf %33, %247 : vector<8x128xf32>
    %586 = arith.mulf %35, %154 : vector<8x128xf32>
    %587 = arith.addf %585, %586 : vector<8x128xf32>
    %588 = arith.mulf %43, %277 : vector<8x128xf32>
    %589 = arith.addf %587, %588 : vector<8x128xf32>
    %590 = arith.mulf %45, %292 : vector<8x128xf32>
    %591 = arith.addf %589, %590 : vector<8x128xf32>
    %592 = arith.mulf %47, %78 : vector<8x128xf32>
    %593 = arith.addf %591, %592 : vector<8x128xf32>
    %594 = arith.mulf %61, %323 : vector<8x128xf32>
    %595 = arith.addf %593, %594 : vector<8x128xf32>
    %596 = arith.mulf %37, %354 : vector<8x128xf32>
    %597 = arith.subf %595, %596 : vector<8x128xf32>
    %598 = arith.mulf %39, %385 : vector<8x128xf32>
    %599 = arith.subf %597, %598 : vector<8x128xf32>
    %600 = arith.mulf %41, %109 : vector<8x128xf32>
    %601 = arith.subf %599, %600 : vector<8x128xf32>
    %602 = arith.mulf %49, %431 : vector<8x128xf32>
    %603 = arith.subf %601, %602 : vector<8x128xf32>
    %604 = arith.mulf %51, %185 : vector<8x128xf32>
    %605 = arith.subf %603, %604 : vector<8x128xf32>
    %606 = arith.mulf %53, %216 : vector<8x128xf32>
    %607 = arith.subf %605, %606 : vector<8x128xf32>
    %608 = arith.mulf %55, %400 : vector<8x128xf32>
    %609 = arith.subf %607, %608 : vector<8x128xf32>
    %610 = arith.mulf %57, %124 : vector<8x128xf32>
    %611 = arith.subf %609, %610 : vector<8x128xf32>
    %612 = arith.mulf %59, %139 : vector<8x128xf32>
    %613 = arith.subf %611, %612 : vector<8x128xf32>
    %614 = arith.mulf %63, %262 : vector<8x128xf32>
    %615 = arith.subf %613, %614 : vector<8x128xf32>
    %616 = arith.mulf %33, %262 : vector<8x128xf32>
    %617 = arith.mulf %37, %139 : vector<8x128xf32>
    %618 = arith.addf %616, %617 : vector<8x128xf32>
    %619 = arith.mulf %41, %400 : vector<8x128xf32>
    %620 = arith.addf %618, %619 : vector<8x128xf32>
    %621 = arith.mulf %49, %78 : vector<8x128xf32>
    %622 = arith.addf %620, %621 : vector<8x128xf32>
    %623 = arith.mulf %53, %277 : vector<8x128xf32>
    %624 = arith.addf %622, %623 : vector<8x128xf32>
    %625 = arith.mulf %61, %154 : vector<8x128xf32>
    %626 = arith.addf %624, %625 : vector<8x128xf32>
    %627 = arith.mulf %39, %124 : vector<8x128xf32>
    %628 = arith.subf %626, %627 : vector<8x128xf32>
    %629 = arith.mulf %51, %292 : vector<8x128xf32>
    %630 = arith.subf %628, %629 : vector<8x128xf32>
    %631 = arith.mulf %33, %277 : vector<8x128xf32>
    %632 = arith.mulf %37, %154 : vector<8x128xf32>
    %633 = arith.addf %631, %632 : vector<8x128xf32>
    %634 = arith.mulf %49, %292 : vector<8x128xf32>
    %635 = arith.addf %633, %634 : vector<8x128xf32>
    %636 = arith.mulf %51, %78 : vector<8x128xf32>
    %637 = arith.addf %635, %636 : vector<8x128xf32>
    %638 = arith.mulf %39, %400 : vector<8x128xf32>
    %639 = arith.subf %637, %638 : vector<8x128xf32>
    %640 = arith.mulf %41, %124 : vector<8x128xf32>
    %641 = arith.subf %639, %640 : vector<8x128xf32>
    %642 = arith.mulf %53, %262 : vector<8x128xf32>
    %643 = arith.subf %641, %642 : vector<8x128xf32>
    %644 = arith.mulf %61, %139 : vector<8x128xf32>
    %645 = arith.subf %643, %644 : vector<8x128xf32>
    %646 = arith.mulf %33, %292 : vector<8x128xf32>
    %647 = arith.mulf %37, %400 : vector<8x128xf32>
    %648 = arith.addf %646, %647 : vector<8x128xf32>
    %649 = arith.mulf %39, %154 : vector<8x128xf32>
    %650 = arith.addf %648, %649 : vector<8x128xf32>
    %651 = arith.mulf %51, %262 : vector<8x128xf32>
    %652 = arith.addf %650, %651 : vector<8x128xf32>
    %653 = arith.mulf %53, %78 : vector<8x128xf32>
    %654 = arith.addf %652, %653 : vector<8x128xf32>
    %655 = arith.mulf %61, %124 : vector<8x128xf32>
    %656 = arith.addf %654, %655 : vector<8x128xf32>
    %657 = arith.mulf %41, %139 : vector<8x128xf32>
    %658 = arith.subf %656, %657 : vector<8x128xf32>
    %659 = arith.mulf %49, %277 : vector<8x128xf32>
    %660 = arith.subf %658, %659 : vector<8x128xf32>
    %661 = arith.mulf %33, %323 : vector<8x128xf32>
    %662 = arith.mulf %35, %262 : vector<8x128xf32>
    %663 = arith.addf %661, %662 : vector<8x128xf32>
    %664 = arith.mulf %39, %185 : vector<8x128xf32>
    %665 = arith.addf %663, %664 : vector<8x128xf32>
    %666 = arith.mulf %43, %139 : vector<8x128xf32>
    %667 = arith.addf %665, %666 : vector<8x128xf32>
    %668 = arith.mulf %47, %400 : vector<8x128xf32>
    %669 = arith.addf %667, %668 : vector<8x128xf32>
    %670 = arith.mulf %49, %109 : vector<8x128xf32>
    %671 = arith.addf %669, %670 : vector<8x128xf32>
    %672 = arith.mulf %53, %354 : vector<8x128xf32>
    %673 = arith.addf %671, %672 : vector<8x128xf32>
    %674 = arith.mulf %55, %78 : vector<8x128xf32>
    %675 = arith.addf %673, %674 : vector<8x128xf32>
    %676 = arith.mulf %59, %277 : vector<8x128xf32>
    %677 = arith.addf %675, %676 : vector<8x128xf32>
    %678 = arith.mulf %63, %154 : vector<8x128xf32>
    %679 = arith.addf %677, %678 : vector<8x128xf32>
    %680 = arith.mulf %37, %216 : vector<8x128xf32>
    %681 = arith.subf %679, %680 : vector<8x128xf32>
    %682 = arith.mulf %41, %431 : vector<8x128xf32>
    %683 = arith.subf %681, %682 : vector<8x128xf32>
    %684 = arith.mulf %45, %124 : vector<8x128xf32>
    %685 = arith.subf %683, %684 : vector<8x128xf32>
    %686 = arith.mulf %51, %385 : vector<8x128xf32>
    %687 = arith.subf %685, %686 : vector<8x128xf32>
    %688 = arith.mulf %57, %292 : vector<8x128xf32>
    %689 = arith.subf %687, %688 : vector<8x128xf32>
    %690 = arith.mulf %61, %247 : vector<8x128xf32>
    %691 = arith.subf %689, %690 : vector<8x128xf32>
    %692 = arith.mulf %33, %354 : vector<8x128xf32>
    %693 = arith.mulf %35, %277 : vector<8x128xf32>
    %694 = arith.addf %692, %693 : vector<8x128xf32>
    %695 = arith.mulf %39, %431 : vector<8x128xf32>
    %696 = arith.addf %694, %695 : vector<8x128xf32>
    %697 = arith.mulf %41, %185 : vector<8x128xf32>
    %698 = arith.addf %696, %697 : vector<8x128xf32>
    %699 = arith.mulf %43, %154 : vector<8x128xf32>
    %700 = arith.addf %698, %699 : vector<8x128xf32>
    %701 = arith.mulf %49, %385 : vector<8x128xf32>
    %702 = arith.addf %700, %701 : vector<8x128xf32>
    %703 = arith.mulf %51, %109 : vector<8x128xf32>
    %704 = arith.addf %702, %703 : vector<8x128xf32>
    %705 = arith.mulf %55, %292 : vector<8x128xf32>
    %706 = arith.addf %704, %705 : vector<8x128xf32>
    %707 = arith.mulf %57, %78 : vector<8x128xf32>
    %708 = arith.addf %706, %707 : vector<8x128xf32>
    %709 = arith.mulf %61, %216 : vector<8x128xf32>
    %710 = arith.addf %708, %709 : vector<8x128xf32>
    %711 = arith.mulf %37, %247 : vector<8x128xf32>
    %712 = arith.subf %710, %711 : vector<8x128xf32>
    %713 = arith.mulf %45, %400 : vector<8x128xf32>
    %714 = arith.subf %712, %713 : vector<8x128xf32>
    %715 = arith.mulf %47, %124 : vector<8x128xf32>
    %716 = arith.subf %714, %715 : vector<8x128xf32>
    %717 = arith.mulf %53, %323 : vector<8x128xf32>
    %718 = arith.subf %716, %717 : vector<8x128xf32>
    %719 = arith.mulf %59, %262 : vector<8x128xf32>
    %720 = arith.subf %718, %719 : vector<8x128xf32>
    %721 = arith.mulf %63, %139 : vector<8x128xf32>
    %722 = arith.subf %720, %721 : vector<8x128xf32>
    %723 = arith.mulf %33, %385 : vector<8x128xf32>
    %724 = arith.mulf %35, %292 : vector<8x128xf32>
    %725 = arith.addf %723, %724 : vector<8x128xf32>
    %726 = arith.mulf %41, %216 : vector<8x128xf32>
    %727 = arith.addf %725, %726 : vector<8x128xf32>
    %728 = arith.mulf %43, %400 : vector<8x128xf32>
    %729 = arith.addf %727, %728 : vector<8x128xf32>
    %730 = arith.mulf %45, %154 : vector<8x128xf32>
    %731 = arith.addf %729, %730 : vector<8x128xf32>
    %732 = arith.mulf %51, %323 : vector<8x128xf32>
    %733 = arith.addf %731, %732 : vector<8x128xf32>
    %734 = arith.mulf %53, %109 : vector<8x128xf32>
    %735 = arith.addf %733, %734 : vector<8x128xf32>
    %736 = arith.mulf %57, %262 : vector<8x128xf32>
    %737 = arith.addf %735, %736 : vector<8x128xf32>
    %738 = arith.mulf %59, %78 : vector<8x128xf32>
    %739 = arith.addf %737, %738 : vector<8x128xf32>
    %740 = arith.mulf %63, %124 : vector<8x128xf32>
    %741 = arith.addf %739, %740 : vector<8x128xf32>
    %742 = arith.mulf %37, %431 : vector<8x128xf32>
    %743 = arith.subf %741, %742 : vector<8x128xf32>
    %744 = arith.mulf %39, %247 : vector<8x128xf32>
    %745 = arith.subf %743, %744 : vector<8x128xf32>
    %746 = arith.mulf %47, %139 : vector<8x128xf32>
    %747 = arith.subf %745, %746 : vector<8x128xf32>
    %748 = arith.mulf %49, %354 : vector<8x128xf32>
    %749 = arith.subf %747, %748 : vector<8x128xf32>
    %750 = arith.mulf %55, %277 : vector<8x128xf32>
    %751 = arith.subf %749, %750 : vector<8x128xf32>
    %752 = arith.mulf %61, %185 : vector<8x128xf32>
    %753 = arith.subf %751, %752 : vector<8x128xf32>
    %754 = arith.mulf %33, %400 : vector<8x128xf32>
    %755 = arith.mulf %37, %292 : vector<8x128xf32>
    %756 = arith.addf %754, %755 : vector<8x128xf32>
    %757 = arith.mulf %41, %262 : vector<8x128xf32>
    %758 = arith.addf %756, %757 : vector<8x128xf32>
    %759 = arith.mulf %49, %154 : vector<8x128xf32>
    %760 = arith.addf %758, %759 : vector<8x128xf32>
    %761 = arith.mulf %53, %124 : vector<8x128xf32>
    %762 = arith.addf %760, %761 : vector<8x128xf32>
    %763 = arith.mulf %61, %78 : vector<8x128xf32>
    %764 = arith.addf %762, %763 : vector<8x128xf32>
    %765 = arith.mulf %39, %277 : vector<8x128xf32>
    %766 = arith.subf %764, %765 : vector<8x128xf32>
    %767 = arith.mulf %51, %139 : vector<8x128xf32>
    %768 = arith.subf %766, %767 : vector<8x128xf32>
    %769 = arith.mulf %33, %431 : vector<8x128xf32>
    %770 = arith.mulf %35, %400 : vector<8x128xf32>
    %771 = arith.addf %769, %770 : vector<8x128xf32>
    %772 = arith.mulf %39, %354 : vector<8x128xf32>
    %773 = arith.addf %771, %772 : vector<8x128xf32>
    %774 = arith.mulf %43, %292 : vector<8x128xf32>
    %775 = arith.addf %773, %774 : vector<8x128xf32>
    %776 = arith.mulf %47, %262 : vector<8x128xf32>
    %777 = arith.addf %775, %776 : vector<8x128xf32>
    %778 = arith.mulf %49, %247 : vector<8x128xf32>
    %779 = arith.addf %777, %778 : vector<8x128xf32>
    %780 = arith.mulf %53, %185 : vector<8x128xf32>
    %781 = arith.addf %779, %780 : vector<8x128xf32>
    %782 = arith.mulf %55, %154 : vector<8x128xf32>
    %783 = arith.addf %781, %782 : vector<8x128xf32>
    %784 = arith.mulf %59, %124 : vector<8x128xf32>
    %785 = arith.addf %783, %784 : vector<8x128xf32>
    %786 = arith.mulf %63, %78 : vector<8x128xf32>
    %787 = arith.addf %785, %786 : vector<8x128xf32>
    %788 = arith.mulf %37, %385 : vector<8x128xf32>
    %789 = arith.subf %787, %788 : vector<8x128xf32>
    %790 = arith.mulf %41, %323 : vector<8x128xf32>
    %791 = arith.subf %789, %790 : vector<8x128xf32>
    %792 = arith.mulf %45, %277 : vector<8x128xf32>
    %793 = arith.subf %791, %792 : vector<8x128xf32>
    %794 = arith.mulf %51, %216 : vector<8x128xf32>
    %795 = arith.subf %793, %794 : vector<8x128xf32>
    %796 = arith.mulf %57, %139 : vector<8x128xf32>
    %797 = arith.subf %795, %796 : vector<8x128xf32>
    %798 = arith.mulf %61, %109 : vector<8x128xf32>
    %799 = arith.subf %797, %798 : vector<8x128xf32>
    %c0_80 = arith.constant 0 : index
    %c0_81 = arith.constant 0 : index
    %c0_82 = arith.constant 0 : index
    %800 = vector.load %arg3[%c0_80, %c0_81, %c0_82] : memref<16x8x128xf32, #tpu.memory_space<vmem>>, vector<1x8x128xf32>
    %801 = vector.shape_cast %800 : vector<1x8x128xf32> to vector<8x128xf32>
    %802 = vector.shape_cast %446 : vector<8x128xf32> to vector<1x8x128xf32>
    tpu.vector_store %arg3[%c0_80, %c0_81, %c0_82], %802 {strides = array<i32>} : memref<16x8x128xf32, #tpu.memory_space<vmem>>, vector<1x8x128xf32>,
    %c1_83 = arith.constant 1 : index
    %c0_84 = arith.constant 0 : index
    %c0_85 = arith.constant 0 : index
    %803 = vector.load %arg3[%c1_83, %c0_84, %c0_85] : memref<16x8x128xf32, #tpu.memory_space<vmem>>, vector<1x8x128xf32>
    %804 = vector.shape_cast %803 : vector<1x8x128xf32> to vector<8x128xf32>
    %805 = vector.shape_cast %477 : vector<8x128xf32> to vector<1x8x128xf32>
    tpu.vector_store %arg3[%c1_83, %c0_84, %c0_85], %805 {strides = array<i32>} : memref<16x8x128xf32, #tpu.memory_space<vmem>>, vector<1x8x128xf32>,
    %c2_86 = arith.constant 2 : index
    %c0_87 = arith.constant 0 : index
    %c0_88 = arith.constant 0 : index
    %806 = vector.load %arg3[%c2_86, %c0_87, %c0_88] : memref<16x8x128xf32, #tpu.memory_space<vmem>>, vector<1x8x128xf32>
    %807 = vector.shape_cast %806 : vector<1x8x128xf32> to vector<8x128xf32>
    %808 = vector.shape_cast %492 : vector<8x128xf32> to vector<1x8x128xf32>
    tpu.vector_store %arg3[%c2_86, %c0_87, %c0_88], %808 {strides = array<i32>} : memref<16x8x128xf32, #tpu.memory_space<vmem>>, vector<1x8x128xf32>,
    %c3_89 = arith.constant 3 : index
    %c0_90 = arith.constant 0 : index
    %c0_91 = arith.constant 0 : index
    %809 = vector.load %arg3[%c3_89, %c0_90, %c0_91] : memref<16x8x128xf32, #tpu.memory_space<vmem>>, vector<1x8x128xf32>
    %810 = vector.shape_cast %809 : vector<1x8x128xf32> to vector<8x128xf32>
    %811 = vector.shape_cast %507 : vector<8x128xf32> to vector<1x8x128xf32>
    tpu.vector_store %arg3[%c3_89, %c0_90, %c0_91], %811 {strides = array<i32>} : memref<16x8x128xf32, #tpu.memory_space<vmem>>, vector<1x8x128xf32>,
    %c4_92 = arith.constant 4 : index
    %c0_93 = arith.constant 0 : index
    %c0_94 = arith.constant 0 : index
    %812 = vector.load %arg3[%c4_92, %c0_93, %c0_94] : memref<16x8x128xf32, #tpu.memory_space<vmem>>, vector<1x8x128xf32>
    %813 = vector.shape_cast %812 : vector<1x8x128xf32> to vector<8x128xf32>
    %814 = vector.shape_cast %522 : vector<8x128xf32> to vector<1x8x128xf32>
    tpu.vector_store %arg3[%c4_92, %c0_93, %c0_94], %814 {strides = array<i32>} : memref<16x8x128xf32, #tpu.memory_space<vmem>>, vector<1x8x128xf32>,
    %c5_95 = arith.constant 5 : index
    %c0_96 = arith.constant 0 : index
    %c0_97 = arith.constant 0 : index
    %815 = vector.load %arg3[%c5_95, %c0_96, %c0_97] : memref<16x8x128xf32, #tpu.memory_space<vmem>>, vector<1x8x128xf32>
    %816 = vector.shape_cast %815 : vector<1x8x128xf32> to vector<8x128xf32>
    %817 = vector.shape_cast %553 : vector<8x128xf32> to vector<1x8x128xf32>
    tpu.vector_store %arg3[%c5_95, %c0_96, %c0_97], %817 {strides = array<i32>} : memref<16x8x128xf32, #tpu.memory_space<vmem>>, vector<1x8x128xf32>,
    %c6_98 = arith.constant 6 : index
    %c0_99 = arith.constant 0 : index
    %c0_100 = arith.constant 0 : index
    %818 = vector.load %arg3[%c6_98, %c0_99, %c0_100] : memref<16x8x128xf32, #tpu.memory_space<vmem>>, vector<1x8x128xf32>
    %819 = vector.shape_cast %818 : vector<1x8x128xf32> to vector<8x128xf32>
    %820 = vector.shape_cast %584 : vector<8x128xf32> to vector<1x8x128xf32>
    tpu.vector_store %arg3[%c6_98, %c0_99, %c0_100], %820 {strides = array<i32>} : memref<16x8x128xf32, #tpu.memory_space<vmem>>, vector<1x8x128xf32>,
    %c7_101 = arith.constant 7 : index
    %c0_102 = arith.constant 0 : index
    %c0_103 = arith.constant 0 : index
    %821 = vector.load %arg3[%c7_101, %c0_102, %c0_103] : memref<16x8x128xf32, #tpu.memory_space<vmem>>, vector<1x8x128xf32>
    %822 = vector.shape_cast %821 : vector<1x8x128xf32> to vector<8x128xf32>
    %823 = vector.shape_cast %615 : vector<8x128xf32> to vector<1x8x128xf32>
    tpu.vector_store %arg3[%c7_101, %c0_102, %c0_103], %823 {strides = array<i32>} : memref<16x8x128xf32, #tpu.memory_space<vmem>>, vector<1x8x128xf32>,
    %c8_104 = arith.constant 8 : index
    %c0_105 = arith.constant 0 : index
    %c0_106 = arith.constant 0 : index
    %824 = vector.load %arg3[%c8_104, %c0_105, %c0_106] : memref<16x8x128xf32, #tpu.memory_space<vmem>>, vector<1x8x128xf32>
    %825 = vector.shape_cast %824 : vector<1x8x128xf32> to vector<8x128xf32>
    %826 = vector.shape_cast %630 : vector<8x128xf32> to vector<1x8x128xf32>
    tpu.vector_store %arg3[%c8_104, %c0_105, %c0_106], %826 {strides = array<i32>} : memref<16x8x128xf32, #tpu.memory_space<vmem>>, vector<1x8x128xf32>,
    %c9_107 = arith.constant 9 : index
    %c0_108 = arith.constant 0 : index
    %c0_109 = arith.constant 0 : index
    %827 = vector.load %arg3[%c9_107, %c0_108, %c0_109] : memref<16x8x128xf32, #tpu.memory_space<vmem>>, vector<1x8x128xf32>
    %828 = vector.shape_cast %827 : vector<1x8x128xf32> to vector<8x128xf32>
    %829 = vector.shape_cast %645 : vector<8x128xf32> to vector<1x8x128xf32>
    tpu.vector_store %arg3[%c9_107, %c0_108, %c0_109], %829 {strides = array<i32>} : memref<16x8x128xf32, #tpu.memory_space<vmem>>, vector<1x8x128xf32>,
    %c10_110 = arith.constant 10 : index
    %c0_111 = arith.constant 0 : index
    %c0_112 = arith.constant 0 : index
    %830 = vector.load %arg3[%c10_110, %c0_111, %c0_112] : memref<16x8x128xf32, #tpu.memory_space<vmem>>, vector<1x8x128xf32>
    %831 = vector.shape_cast %830 : vector<1x8x128xf32> to vector<8x128xf32>
    %832 = vector.shape_cast %660 : vector<8x128xf32> to vector<1x8x128xf32>
    tpu.vector_store %arg3[%c10_110, %c0_111, %c0_112], %832 {strides = array<i32>} : memref<16x8x128xf32, #tpu.memory_space<vmem>>, vector<1x8x128xf32>,
    %c11_113 = arith.constant 11 : index
    %c0_114 = arith.constant 0 : index
    %c0_115 = arith.constant 0 : index
    %833 = vector.load %arg3[%c11_113, %c0_114, %c0_115] : memref<16x8x128xf32, #tpu.memory_space<vmem>>, vector<1x8x128xf32>
    %834 = vector.shape_cast %833 : vector<1x8x128xf32> to vector<8x128xf32>
    %835 = vector.shape_cast %691 : vector<8x128xf32> to vector<1x8x128xf32>
    tpu.vector_store %arg3[%c11_113, %c0_114, %c0_115], %835 {strides = array<i32>} : memref<16x8x128xf32, #tpu.memory_space<vmem>>, vector<1x8x128xf32>,
    %c12_116 = arith.constant 12 : index
    %c0_117 = arith.constant 0 : index
    %c0_118 = arith.constant 0 : index
    %836 = vector.load %arg3[%c12_116, %c0_117, %c0_118] : memref<16x8x128xf32, #tpu.memory_space<vmem>>, vector<1x8x128xf32>
    %837 = vector.shape_cast %836 : vector<1x8x128xf32> to vector<8x128xf32>
    %838 = vector.shape_cast %722 : vector<8x128xf32> to vector<1x8x128xf32>
    tpu.vector_store %arg3[%c12_116, %c0_117, %c0_118], %838 {strides = array<i32>} : memref<16x8x128xf32, #tpu.memory_space<vmem>>, vector<1x8x128xf32>,
    %c13_119 = arith.constant 13 : index
    %c0_120 = arith.constant 0 : index
    %c0_121 = arith.constant 0 : index
    %839 = vector.load %arg3[%c13_119, %c0_120, %c0_121] : memref<16x8x128xf32, #tpu.memory_space<vmem>>, vector<1x8x128xf32>
    %840 = vector.shape_cast %839 : vector<1x8x128xf32> to vector<8x128xf32>
    %841 = vector.shape_cast %753 : vector<8x128xf32> to vector<1x8x128xf32>
    tpu.vector_store %arg3[%c13_119, %c0_120, %c0_121], %841 {strides = array<i32>} : memref<16x8x128xf32, #tpu.memory_space<vmem>>, vector<1x8x128xf32>,
    %c14_122 = arith.constant 14 : index
    %c0_123 = arith.constant 0 : index
    %c0_124 = arith.constant 0 : index
    %842 = vector.load %arg3[%c14_122, %c0_123, %c0_124] : memref<16x8x128xf32, #tpu.memory_space<vmem>>, vector<1x8x128xf32>
    %843 = vector.shape_cast %842 : vector<1x8x128xf32> to vector<8x128xf32>
    %844 = vector.shape_cast %768 : vector<8x128xf32> to vector<1x8x128xf32>
    tpu.vector_store %arg3[%c14_122, %c0_123, %c0_124], %844 {strides = array<i32>} : memref<16x8x128xf32, #tpu.memory_space<vmem>>, vector<1x8x128xf32>,
    %c15_125 = arith.constant 15 : index
    %c0_126 = arith.constant 0 : index
    %c0_127 = arith.constant 0 : index
    %845 = vector.load %arg3[%c15_125, %c0_126, %c0_127] : memref<16x8x128xf32, #tpu.memory_space<vmem>>, vector<1x8x128xf32>
    %846 = vector.shape_cast %845 : vector<1x8x128xf32> to vector<8x128xf32>
    %847 = vector.shape_cast %799 : vector<8x128xf32> to vector<1x8x128xf32>
    tpu.vector_store %arg3[%c15_125, %c0_126, %c0_127], %847 {strides = array<i32>} : memref<16x8x128xf32, #tpu.memory_space<vmem>>, vector<1x8x128xf32>,
    return
  }
  func.func @transform_0(%arg0: i32) -> (i32, i32, i32) {
    %c0_i32 = arith.constant 0 : i32
    %c0_i32_0 = arith.constant 0 : i32
    %c0_i32_1 = arith.constant 0 : i32
    return %c0_i32, %arg0, %c0_i32_0 : i32, i32, i32
  }
  func.func @transform_1(%arg0: i32) -> (i32, i32, i32) {
    %c0_i32 = arith.constant 0 : i32
    %c0_i32_0 = arith.constant 0 : i32
    %c0_i32_1 = arith.constant 0 : i32
    return %c0_i32, %arg0, %c0_i32_0 : i32, i32, i32
  }
  func.func @transform_2(%arg0: i32) -> (i32, i32, i32) {
    %c0_i32 = arith.constant 0 : i32
    %c0_i32_0 = arith.constant 0 : i32
    %c0_i32_1 = arith.constant 0 : i32
    return %c0_i32, %arg0, %c0_i32_0 : i32, i32, i32
  }
}

</mosaic_0001>

<llo_original>
// kernel: ga_versor_forward.1
$region0: #{ga_versor_forward.1}
  #allocation0 [shape = 'u32[]', space=smem, size = 0x4, offset = 0x4, fixed_abs, tag = 'smem constant byte address 0x4 - core index']
  #allocation1 [shape = 'u32[144,128]{1,0:T(1,128)}', space=vmem, size = 0x12000, scoped, tag = 'internal scratch']
  %s0 = inlined_call_operand.vmem [shape: f32[16,8,128], index: 0, kind: input, shape index: {}]
  %s1 = inlined_call_operand.vmem [shape: f32[16,8,128], index: 1, kind: input, shape index: {}]
  %s2 = inlined_call_operand.vmem [shape: f32[16,8,128], index: 2, kind: output, shape index: {}]
  %s3 = sld [smem:[#allocation0]]
  $region18: #{ga_versor_forward.1} parent=0
    _
  %s5 = ssub.s32 1, %s3
  %s6 = scalar_select 0, %s5, %s3
  // Predicated region
  $region2: #{ga_versor_forward.1} parent=0 // pred_check
    _
  $region3: #{ga_versor_forward.1} parent=0 // pred_check_branch
    %8 = sbr.rel (0) target = $region5
  $region4: #{ga_versor_forward.1} parent=0 // pred_region
    _
  $region5: #{ga_versor_forward.1} parent=0 // pred_fallthru
    _
  // Predicated region
  $region6: #{ga_versor_forward.1} parent=0 // pred_check
    _
  $region7: #{ga_versor_forward.1} parent=0 // pred_check_branch
    %10 = sbr.rel (0) target = $region9
  $region8: #{ga_versor_forward.1} parent=0 // pred_region
    _
  $region9: #{ga_versor_forward.1} parent=0 // pred_fallthru
    _
  %v11 = vld [vmem:[%s0] sm:$0xff]
  %s12 = scalar_lea.vmem %s0, 8
  %v13 = vld [vmem:[%s12] sm:$0xff]
  %s14 = scalar_lea.vmem %s0, 16
  %v15 = vld [vmem:[%s14] sm:$0xff]
  %s16 = scalar_lea.vmem %s0, 24
  %v17 = vld [vmem:[%s16] sm:$0xff]
  %s18 = scalar_lea.vmem %s0, 32
  %v19 = vld [vmem:[%s18] sm:$0xff]
  %s20 = scalar_lea.vmem %s0, 40
  %v21 = vld [vmem:[%s20] sm:$0xff]
  %s22 = scalar_lea.vmem %s0, 48
  %v23 = vld [vmem:[%s22] sm:$0xff]
  %s24 = scalar_lea.vmem %s0, 56
  %v25 = vld [vmem:[%s24] sm:$0xff]
  %s26 = scalar_lea.vmem %s0, 64
  %v27 = vld [vmem:[%s26] sm:$0xff]
  %s28 = scalar_lea.vmem %s0, 72
  %v29 = vld [vmem:[%s28] sm:$0xff]
  %s30 = scalar_lea.vmem %s0, 80
  %v31 = vld [vmem:[%s30] sm:$0xff]
  %s32 = scalar_lea.vmem %s0, 88
  %v33 = vld [vmem:[%s32] sm:$0xff]
  %s34 = scalar_lea.vmem %s0, 96
  %v35 = vld [vmem:[%s34] sm:$0xff]
  %s36 = scalar_lea.vmem %s0, 104
  %v37 = vld [vmem:[%s36] sm:$0xff]
  %s38 = scalar_lea.vmem %s0, 112
  %v39 = vld [vmem:[%s38] sm:$0xff]
  %s40 = scalar_lea.vmem %s0, 120
  %v41 = vld [vmem:[%s40] sm:$0xff]
  %v42 = vld [vmem:[%s1] sm:$0xff]
  %s43 = scalar_lea.vmem %s1, 8
  %v44 = vld [vmem:[%s43] sm:$0xff]
  %s45 = scalar_lea.vmem %s1, 16
  %v46 = vld [vmem:[%s45] sm:$0xff]
  %s47 = scalar_lea.vmem %s1, 24
  %v48 = vld [vmem:[%s47] sm:$0xff]
  %s49 = scalar_lea.vmem %s1, 32
  %v50 = vld [vmem:[%s49] sm:$0xff]
  %s51 = scalar_lea.vmem %s1, 40
  %v52 = vld [vmem:[%s51] sm:$0xff]
  %s53 = scalar_lea.vmem %s1, 48
  %v54 = vld [vmem:[%s53] sm:$0xff]
  %s55 = scalar_lea.vmem %s1, 56
  %v56 = vld [vmem:[%s55] sm:$0xff]
  %s57 = scalar_lea.vmem %s1, 64
  %v58 = vld [vmem:[%s57] sm:$0xff]
  %s59 = scalar_lea.vmem %s1, 72
  %v60 = vld [vmem:[%s59] sm:$0xff]
  %s61 = scalar_lea.vmem %s1, 80
  %v62 = vld [vmem:[%s61] sm:$0xff]
  %s63 = scalar_lea.vmem %s1, 88
  %v64 = vld [vmem:[%s63] sm:$0xff]
  %s65 = scalar_lea.vmem %s1, 96
  %v66 = vld [vmem:[%s65] sm:$0xff]
  %s67 = scalar_lea.vmem %s1, 104
  %v68 = vld [vmem:[%s67] sm:$0xff]
  %s69 = scalar_lea.vmem %s1, 112
  %v70 = vld [vmem:[%s69] sm:$0xff]
  %s71 = scalar_lea.vmem %s1, 120
  %v72 = vld [vmem:[%s71] sm:$0xff]
  %v73 = vmul.f32 %v11, %v42
  %v74 = vmul.f32 %v15, %v46
  %v75 = vadd.f32 %v73, %v74
  %v76 = vmul.f32 %v17, %v48
  %v77 = vadd.f32 %v75, %v76
  %v78 = vmul.f32 %v19, %v50
  %v79 = vadd.f32 %v77, %v78
  %v80 = vmul.f32 %v27, %v58
  %v81 = vadd.f32 %v79, %v80
  %v82 = vmul.f32 %v29, %v60
  %v83 = vadd.f32 %v81, %v82
  %v84 = vmul.f32 %v31, %v62
  %v85 = vadd.f32 %v83, %v84
  %v86 = vmul.f32 %v39, %v70
  %v87 = vadd.f32 %v85, %v86
  %v88 = vmul.f32 %v11, %v44
  %v89 = vmul.f32 %v13, %v42
  %v90 = vadd.f32 %v88, %v89
  %v91 = vmul.f32 %v15, %v52
  %v92 = vadd.f32 %v90, %v91
  %v93 = vmul.f32 %v17, %v54
  %v94 = vadd.f32 %v92, %v93
  %v95 = vmul.f32 %v19, %v56
  %v96 = vadd.f32 %v94, %v95
  %v97 = vmul.f32 %v21, %v46
  %v98 = vadd.f32 %v96, %v97
  %v99 = vmul.f32 %v23, %v48
  %v100 = vadd.f32 %v98, %v99
  %v101 = vmul.f32 %v25, %v50
  %v102 = vadd.f32 %v100, %v101
  %v103 = vmul.f32 %v27, %v64
  %v104 = vadd.f32 %v102, %v103
  %v105 = vmul.f32 %v29, %v66
  %v106 = vadd.f32 %v104, %v105
  %v107 = vmul.f32 %v31, %v68
  %v108 = vadd.f32 %v106, %v107
  %v109 = vmul.f32 %v33, %v58
  %v110 = vadd.f32 %v108, %v109
  %v111 = vmul.f32 %v35, %v60
  %v112 = vadd.f32 %v110, %v111
  %v113 = vmul.f32 %v37, %v62
  %v114 = vadd.f32 %v112, %v113
  %v115 = vmul.f32 %v39, %v72
  %v116 = vadd.f32 %v114, %v115
  %v117 = vmul.f32 %v41, %v70
  %v118 = vadd.f32 %v116, %v117
  %v119 = vmul.f32 %v11, %v46
  %v120 = vmul.f32 %v15, %v42
  %v121 = vadd.f32 %v119, %v120
  %v122 = vmul.f32 %v17, %v58
  %v123 = vadd.f32 %v121, %v122
  %v124 = vmul.f32 %v19, %v60
  %v125 = vadd.f32 %v123, %v124
  %v126 = vmul.f32 %v27, %v48
  %v127 = vadd.f32 %v125, %v126
  %v128 = vmul.f32 %v29, %v50
  %v129 = vadd.f32 %v127, %v128
  %v130 = vmul.f32 %v31, %v70
  %v131 = vadd.f32 %v129, %v130
  %v132 = vmul.f32 %v39, %v62
  %v133 = vadd.f32 %v131, %v132
  %v134 = vmul.f32 %v11, %v48
  %v135 = vmul.f32 %v17, %v42
  %v136 = vadd.f32 %v134, %v135
  %v137 = vmul.f32 %v19, %v62
  %v138 = vadd.f32 %v136, %v137
  %v139 = vmul.f32 %v31, %v50
  %v140 = vadd.f32 %v138, %v139
  %v141 = vmul.f32 %v15, %v58
  %v142 = vsub.f32 %v140, %v141
  %v143 = vmul.f32 %v27, %v46
  %v144 = vsub.f32 %v142, %v143
  %v145 = vmul.f32 %v29, %v70
  %v146 = vsub.f32 %v144, %v145
  %v147 = vmul.f32 %v39, %v60
  %v148 = vsub.f32 %v146, %v147
  %v149 = vmul.f32 %v11, %v50
  %v150 = vmul.f32 %v19, %v42
  %v151 = vadd.f32 %v149, %v150
  %v152 = vmul.f32 %v27, %v70
  %v153 = vadd.f32 %v151, %v152
  %v154 = vmul.f32 %v39, %v58
  %v155 = vadd.f32 %v153, %v154
  %v156 = vmul.f32 %v15, %v60
  %v157 = vsub.f32 %v155, %v156
  %v158 = vmul.f32 %v17, %v62
  %v159 = vsub.f32 %v157, %v158
  %v160 = vmul.f32 %v29, %v46
  %v161 = vsub.f32 %v159, %v160
  %v162 = vmul.f32 %v31, %v48
  %v163 = vsub.f32 %v161, %v162
  %v164 = vmul.f32 %v13, %v46
  %v165 = vmul.f32 %v21, %v42
  %v166 = vadd.f32 %v164, %v165
  %v167 = vmul.f32 %v23, %v58
  %v168 = vadd.f32 %v166, %v167
  %v169 = vmul.f32 %v25, %v60
  %v170 = vadd.f32 %v168, %v169
  %v171 = vmul.f32 %v33, %v48
  %v172 = vadd.f32 %v170, %v171
  %v173 = vmul.f32 %v35, %v50
  %v174 = vadd.f32 %v172, %v173
  %v175 = vmul.f32 %v37, %v70
  %v176 = vadd.f32 %v174, %v175
  %v177 = vmul.f32 %v41, %v62
  %v178 = vadd.f32 %v176, %v177
  %v179 = vmul.f32 %v11, %v52
  %v180 = vsub.f32 %v178, %v179
  %v181 = vmul.f32 %v15, %v44
  %v182 = vsub.f32 %v180, %v181
  %v183 = vmul.f32 %v17, %v64
  %v184 = vsub.f32 %v182, %v183
  %v185 = vmul.f32 %v19, %v66
  %v186 = vsub.f32 %v184, %v185
  %v187 = vmul.f32 %v27, %v54
  %v188 = vsub.f32 %v186, %v187
  %v189 = vmul.f32 %v29, %v56
  %v190 = vsub.f32 %v188, %v189
  %v191 = vmul.f32 %v31, %v72
  %v192 = vsub.f32 %v190, %v191
  %v193 = vmul.f32 %v39, %v68
  %v194 = vsub.f32 %v192, %v193
  %v195 = vmul.f32 %v13, %v48
  %v196 = vmul.f32 %v15, %v64
  %v197 = vadd.f32 %v195, %v196
  %v198 = vmul.f32 %v23, %v42
  %v199 = vadd.f32 %v197, %v198
  %v200 = vmul.f32 %v25, %v62
  %v201 = vadd.f32 %v199, %v200
  %v202 = vmul.f32 %v27, %v52
  %v203 = vadd.f32 %v201, %v202
  %v204 = vmul.f32 %v29, %v72
  %v205 = vadd.f32 %v203, %v204
  %v206 = vmul.f32 %v37, %v50
  %v207 = vadd.f32 %v205, %v206
  %v208 = vmul.f32 %v39, %v66
  %v209 = vadd.f32 %v207, %v208
  %v210 = vmul.f32 %v11, %v54
  %v211 = vsub.f32 %v209, %v210
  %v212 = vmul.f32 %v17, %v44
  %v213 = vsub.f32 %v211, %v212
  %v214 = vmul.f32 %v19, %v68
  %v215 = vsub.f32 %v213, %v214
  %v216 = vmul.f32 %v21, %v58
  %v217 = vsub.f32 %v215, %v216
  %v218 = vmul.f32 %v31, %v56
  %v219 = vsub.f32 %v217, %v218
  %v220 = vmul.f32 %v33, %v46
  %v221 = vsub.f32 %v219, %v220
  %v222 = vmul.f32 %v35, %v70
  %v223 = vsub.f32 %v221, %v222
  %v224 = vmul.f32 %v41, %v60
  %v225 = vsub.f32 %v223, %v224
  %v226 = vmul.f32 %v13, %v50
  %v227 = vmul.f32 %v15, %v66
  %v228 = vadd.f32 %v226, %v227
  %v229 = vmul.f32 %v17, %v68
  %v230 = vadd.f32 %v228, %v229
  %v231 = vmul.f32 %v25, %v42
  %v232 = vadd.f32 %v230, %v231
  %v233 = vmul.f32 %v29, %v52
  %v234 = vadd.f32 %v232, %v233
  %v235 = vmul.f32 %v31, %v54
  %v236 = vadd.f32 %v234, %v235
  %v237 = vmul.f32 %v33, %v70
  %v238 = vadd.f32 %v236, %v237
  %v239 = vmul.f32 %v41, %v58
  %v240 = vadd.f32 %v238, %v239
  %v241 = vmul.f32 %v11, %v56
  %v242 = vsub.f32 %v240, %v241
  %v243 = vmul.f32 %v19, %v44
  %v244 = vsub.f32 %v242, %v243
  %v245 = vmul.f32 %v21, %v60
  %v246 = vsub.f32 %v244, %v245
  %v247 = vmul.f32 %v23, %v62
  %v248 = vsub.f32 %v246, %v247
  %v249 = vmul.f32 %v27, %v72
  %v250 = vsub.f32 %v248, %v249
  %v251 = vmul.f32 %v35, %v46
  %v252 = vsub.f32 %v250, %v251
  %v253 = vmul.f32 %v37, %v48
  %v254 = vsub.f32 %v252, %v253
  %v255 = vmul.f32 %v39, %v64
  %v256 = vsub.f32 %v254, %v255
  %v257 = vmul.f32 %v15, %v48
  %v258 = vmul.f32 %v27, %v42
  %v259 = vadd.f32 %v257, %v258
  %v260 = vmul.f32 %v29, %v62
  %v261 = vadd.f32 %v259, %v260
  %v262 = vmul.f32 %v39, %v50
  %v263 = vadd.f32 %v261, %v262
  %v264 = vmul.f32 %v11, %v58
  %v265 = vsub.f32 %v263, %v264
  %v266 = vmul.f32 %v17, %v46
  %v267 = vsub.f32 %v265, %v266
  %v268 = vmul.f32 %v19, %v70
  %v269 = vsub.f32 %v267, %v268
  %v270 = vmul.f32 %v31, %v60
  %v271 = vsub.f32 %v269, %v270
  %v272 = vmul.f32 %v15, %v50
  %v273 = vmul.f32 %v17, %v70
  %v274 = vadd.f32 %v272, %v273
  %v275 = vmul.f32 %v29, %v42
  %v276 = vadd.f32 %v274, %v275
  %v277 = vmul.f32 %v31, %v58
  %v278 = vadd.f32 %v276, %v277
  %v279 = vmul.f32 %v11, %v60
  %v280 = vsub.f32 %v278, %v279
  %v281 = vmul.f32 %v19, %v46
  %v282 = vsub.f32 %v280, %v281
  %v283 = vmul.f32 %v27, %v62
  %v284 = vsub.f32 %v282, %v283
  %v285 = vmul.f32 %v39, %v48
  %v286 = vsub.f32 %v284, %v285
  %v287 = vmul.f32 %v17, %v50
  %v288 = vmul.f32 %v27, %v60
  %v289 = vadd.f32 %v287, %v288
  %v290 = vmul.f32 %v31, %v42
  %v291 = vadd.f32 %v289, %v290
  %v292 = vmul.f32 %v39, %v46
  %v293 = vadd.f32 %v291, %v292
  %v294 = vmul.f32 %v11, %v62
  %v295 = vsub.f32 %v293, %v294
  %v296 = vmul.f32 %v15, %v70
  %v297 = vsub.f32 %v295, %v296
  %v298 = vmul.f32 %v19, %v48
  %v299 = vsub.f32 %v297, %v298
  %v300 = vmul.f32 %v29, %v58
  %v301 = vsub.f32 %v299, %v300
  %v302 = vmul.f32 %v15, %v54
  %v303 = vmul.f32 %v21, %v48
  %v304 = vadd.f32 %v302, %v303
  %v305 = vmul.f32 %v27, %v44
  %v306 = vadd.f32 %v304, %v305
  %v307 = vmul.f32 %v29, %v68
  %v308 = vadd.f32 %v306, %v307
  %v309 = vmul.f32 %v33, %v42
  %v310 = vadd.f32 %v308, %v309
  %v311 = vmul.f32 %v35, %v62
  %v312 = vadd.f32 %v310, %v311
  %v313 = vmul.f32 %v39, %v56
  %v314 = vadd.f32 %v312, %v313
  %v315 = vmul.f32 %v41, %v50
  %v316 = vadd.f32 %v314, %v315
  %v317 = vmul.f32 %v11, %v64
  %v318 = vsub.f32 %v316, %v317
  %v319 = vmul.f32 %v13, %v58
  %v320 = vsub.f32 %v318, %v319
  %v321 = vmul.f32 %v17, %v52
  %v322 = vsub.f32 %v320, %v321
  %v323 = vmul.f32 %v19, %v72
  %v324 = vsub.f32 %v322, %v323
  %v325 = vmul.f32 %v23, %v46
  %v326 = vsub.f32 %v324, %v325
  %v327 = vmul.f32 %v25, %v70
  %v328 = vsub.f32 %v326, %v327
  %v329 = vmul.f32 %v31, %v66
  %v330 = vsub.f32 %v328, %v329
  %v331 = vmul.f32 %v37, %v60
  %v332 = vsub.f32 %v330, %v331
  %v333 = vmul.f32 %v15, %v56
  %v334 = vmul.f32 %v17, %v72
  %v335 = vadd.f32 %v333, %v334
  %v336 = vmul.f32 %v21, %v50
  %v337 = vadd.f32 %v335, %v336
  %v338 = vmul.f32 %v23, %v70
  %v339 = vadd.f32 %v337, %v338
  %v340 = vmul.f32 %v29, %v44
  %v341 = vadd.f32 %v339, %v340
  %v342 = vmul.f32 %v31, %v64
  %v343 = vadd.f32 %v341, %v342
  %v344 = vmul.f32 %v35, %v42
  %v345 = vadd.f32 %v343, %v344
  %v346 = vmul.f32 %v37, %v58
  %v347 = vadd.f32 %v345, %v346
  %v348 = vmul.f32 %v11, %v66
  %v349 = vsub.f32 %v347, %v348
  %v350 = vmul.f32 %v13, %v60
  %v351 = vsub.f32 %v349, %v350
  %v352 = vmul.f32 %v19, %v52
  %v353 = vsub.f32 %v351, %v352
  %v354 = vmul.f32 %v25, %v46
  %v355 = vsub.f32 %v353, %v354
  %v356 = vmul.f32 %v27, %v68
  %v357 = vsub.f32 %v355, %v356
  %v358 = vmul.f32 %v33, %v62
  %v359 = vsub.f32 %v357, %v358
  %v360 = vmul.f32 %v39, %v54
  %v361 = vsub.f32 %v359, %v360
  %v362 = vmul.f32 %v41, %v48
  %v363 = vsub.f32 %v361, %v362
  %v364 = vmul.f32 %v17, %v56
  %v365 = vmul.f32 %v23, %v50
  %v366 = vadd.f32 %v364, %v365
  %v367 = vmul.f32 %v27, %v66
  %v368 = vadd.f32 %v366, %v367
  %v369 = vmul.f32 %v31, %v44
  %v370 = vadd.f32 %v368, %v369
  %v371 = vmul.f32 %v33, %v60
  %v372 = vadd.f32 %v370, %v371
  %v373 = vmul.f32 %v37, %v42
  %v374 = vadd.f32 %v372, %v373
  %v375 = vmul.f32 %v39, %v52
  %v376 = vadd.f32 %v374, %v375
  %v377 = vmul.f32 %v41, %v46
  %v378 = vadd.f32 %v376, %v377
  %v379 = vmul.f32 %v11, %v68
  %v380 = vsub.f32 %v378, %v379
  %v381 = vmul.f32 %v13, %v62
  %v382 = vsub.f32 %v380, %v381
  %v383 = vmul.f32 %v15, %v72
  %v384 = vsub.f32 %v382, %v383
  %v385 = vmul.f32 %v19, %v54
  %v386 = vsub.f32 %v384, %v385
  %v387 = vmul.f32 %v21, %v70
  %v388 = vsub.f32 %v386, %v387
  %v389 = vmul.f32 %v25, %v48
  %v390 = vsub.f32 %v388, %v389
  %v391 = vmul.f32 %v29, %v64
  %v392 = vsub.f32 %v390, %v391
  %v393 = vmul.f32 %v35, %v58
  %v394 = vsub.f32 %v392, %v393
  %v395 = vmul.f32 %v17, %v60
  %v396 = vmul.f32 %v27, %v50
  %v397 = vadd.f32 %v395, %v396
  %v398 = vmul.f32 %v31, %v46
  %v399 = vadd.f32 %v397, %v398
  %v400 = vmul.f32 %v39, %v42
  %v401 = vadd.f32 %v399, %v400
  %v402 = vmul.f32 %v11, %v70
  %v403 = vsub.f32 %v401, %v402
  %v404 = vmul.f32 %v15, %v62
  %v405 = vsub.f32 %v403, %v404
  %v406 = vmul.f32 %v19, %v58
  %v407 = vsub.f32 %v405, %v406
  %v408 = vmul.f32 %v29, %v48
  %v409 = vsub.f32 %v407, %v408
  %v410 = vmul.f32 %v11, %v72
  %v411 = vmul.f32 %v15, %v68
  %v412 = vadd.f32 %v410, %v411
  %v413 = vmul.f32 %v19, %v64
  %v414 = vadd.f32 %v412, %v413
  %v415 = vmul.f32 %v23, %v60
  %v416 = vadd.f32 %v414, %v415
  %v417 = vmul.f32 %v29, %v54
  %v418 = vadd.f32 %v416, %v417
  %v419 = vmul.f32 %v33, %v50
  %v420 = vadd.f32 %v418, %v419
  %v421 = vmul.f32 %v37, %v46
  %v422 = vadd.f32 %v420, %v421
  %v423 = vmul.f32 %v41, %v42
  %v424 = vadd.f32 %v422, %v423
  %v425 = vmul.f32 %v13, %v70
  %v426 = vsub.f32 %v424, %v425
  %v427 = vmul.f32 %v17, %v66
  %v428 = vsub.f32 %v426, %v427
  %v429 = vmul.f32 %v21, %v62
  %v430 = vsub.f32 %v428, %v429
  %v431 = vmul.f32 %v25, %v58
  %v432 = vsub.f32 %v430, %v431
  %v433 = vmul.f32 %v27, %v56
  %v434 = vsub.f32 %v432, %v433
  %v435 = vmul.f32 %v31, %v52
  %v436 = vsub.f32 %v434, %v435
  %v437 = vmul.f32 %v35, %v48
  %v438 = vsub.f32 %v436, %v437
  %v439 = vmul.f32 %v39, %v44
  %v440 = vsub.f32 %v438, %v439
  %v441 = vmul.f32 %v42, %v87
  %v442 = vmul.f32 %v46, %v133
  %v443 = vadd.f32 %v441, %v442
  %v444 = vmul.f32 %v48, %v148
  %v445 = vadd.f32 %v443, %v444
  %v446 = vmul.f32 %v50, %v163
  %v447 = vadd.f32 %v445, %v446
  %v448 = vmul.f32 %v58, %v271
  %v449 = vsub.f32 %v447, %v448
  %v450 = vmul.f32 %v60, %v286
  %v451 = vsub.f32 %v449, %v450
  %v452 = vmul.f32 %v62, %v301
  %v453 = vsub.f32 %v451, %v452
  %v454 = vmul.f32 %v70, %v409
  %v455 = vsub.f32 %v453, %v454
  %v456 = vmul.f32 %v42, %v118
  %v457 = vmul.f32 %v44, %v87
  %v458 = vadd.f32 %v456, %v457
  %v459 = vmul.f32 %v52, %v133
  %v460 = vadd.f32 %v458, %v459
  %v461 = vmul.f32 %v54, %v148
  %v462 = vadd.f32 %v460, %v461
  %v463 = vmul.f32 %v56, %v163
  %v464 = vadd.f32 %v462, %v463
  %v465 = vmul.f32 %v70, %v440
  %v466 = vadd.f32 %v464, %v465
  %v467 = vmul.f32 %v46, %v194
  %v468 = vsub.f32 %v466, %v467
  %v469 = vmul.f32 %v48, %v225
  %v470 = vsub.f32 %v468, %v469
  %v471 = vmul.f32 %v50, %v256
  %v472 = vsub.f32 %v470, %v471
  %v473 = vmul.f32 %v58, %v332
  %v474 = vsub.f32 %v472, %v473
  %v475 = vmul.f32 %v60, %v363
  %v476 = vsub.f32 %v474, %v475
  %v477 = vmul.f32 %v62, %v394
  %v478 = vsub.f32 %v476, %v477
  %v479 = vmul.f32 %v64, %v271
  %v480 = vsub.f32 %v478, %v479
  %v481 = vmul.f32 %v66, %v286
  %v482 = vsub.f32 %v480, %v481
  %v483 = vmul.f32 %v68, %v301
  %v484 = vsub.f32 %v482, %v483
  %v485 = vmul.f32 %v72, %v409
  %v486 = vsub.f32 %v484, %v485
  %v487 = vmul.f32 %v42, %v133
  %v488 = vmul.f32 %v46, %v87
  %v489 = vadd.f32 %v487, %v488
  %v490 = vmul.f32 %v58, %v148
  %v491 = vadd.f32 %v489, %v490
  %v492 = vmul.f32 %v60, %v163
  %v493 = vadd.f32 %v491, %v492
  %v494 = vmul.f32 %v48, %v271
  %v495 = vsub.f32 %v493, %v494
  %v496 = vmul.f32 %v50, %v286
  %v497 = vsub.f32 %v495, %v496
  %v498 = vmul.f32 %v62, %v409
  %v499 = vsub.f32 %v497, %v498
  %v500 = vmul.f32 %v70, %v301
  %v501 = vsub.f32 %v499, %v500
  %v502 = vmul.f32 %v42, %v148
  %v503 = vmul.f32 %v46, %v271
  %v504 = vadd.f32 %v502, %v503
  %v505 = vmul.f32 %v48, %v87
  %v506 = vadd.f32 %v504, %v505
  %v507 = vmul.f32 %v60, %v409
  %v508 = vadd.f32 %v506, %v507
  %v509 = vmul.f32 %v62, %v163
  %v510 = vadd.f32 %v508, %v509
  %v511 = vmul.f32 %v70, %v286
  %v512 = vadd.f32 %v510, %v511
  %v513 = vmul.f32 %v50, %v301
  %v514 = vsub.f32 %v512, %v513
  %v515 = vmul.f32 %v58, %v133
  %v516 = vsub.f32 %v514, %v515
  %v517 = vmul.f32 %v42, %v163
  %v518 = vmul.f32 %v46, %v286
  %v519 = vadd.f32 %v517, %v518
  %v520 = vmul.f32 %v48, %v301
  %v521 = vadd.f32 %v519, %v520
  %v522 = vmul.f32 %v50, %v87
  %v523 = vadd.f32 %v521, %v522
  %v524 = vmul.f32 %v58, %v409
  %v525 = vsub.f32 %v523, %v524
  %v526 = vmul.f32 %v60, %v133
  %v527 = vsub.f32 %v525, %v526
  %v528 = vmul.f32 %v62, %v148
  %v529 = vsub.f32 %v527, %v528
  %v530 = vmul.f32 %v70, %v271
  %v531 = vsub.f32 %v529, %v530
  %v532 = vmul.f32 %v42, %v194
  %v533 = vmul.f32 %v44, %v133
  %v534 = vadd.f32 %v532, %v533
  %v535 = vmul.f32 %v48, %v332
  %v536 = vadd.f32 %v534, %v535
  %v537 = vmul.f32 %v50, %v363
  %v538 = vadd.f32 %v536, %v537
  %v539 = vmul.f32 %v52, %v87
  %v540 = vadd.f32 %v538, %v539
  %v541 = vmul.f32 %v58, %v225
  %v542 = vadd.f32 %v540, %v541
  %v543 = vmul.f32 %v60, %v256
  %v544 = vadd.f32 %v542, %v543
  %v545 = vmul.f32 %v64, %v148
  %v546 = vadd.f32 %v544, %v545
  %v547 = vmul.f32 %v66, %v163
  %v548 = vadd.f32 %v546, %v547
  %v549 = vmul.f32 %v70, %v394
  %v550 = vadd.f32 %v548, %v549
  %v551 = vmul.f32 %v46, %v118
  %v552 = vsub.f32 %v550, %v551
  %v553 = vmul.f32 %v54, %v271
  %v554 = vsub.f32 %v552, %v553
  %v555 = vmul.f32 %v56, %v286
  %v556 = vsub.f32 %v554, %v555
  %v557 = vmul.f32 %v62, %v440
  %v558 = vsub.f32 %v556, %v557
  %v559 = vmul.f32 %v68, %v409
  %v560 = vsub.f32 %v558, %v559
  %v561 = vmul.f32 %v72, %v301
  %v562 = vsub.f32 %v560, %v561
  %v563 = vmul.f32 %v42, %v225
  %v564 = vmul.f32 %v44, %v148
  %v565 = vadd.f32 %v563, %v564
  %v566 = vmul.f32 %v50, %v394
  %v567 = vadd.f32 %v565, %v566
  %v568 = vmul.f32 %v52, %v271
  %v569 = vadd.f32 %v567, %v568
  %v570 = vmul.f32 %v54, %v87
  %v571 = vadd.f32 %v569, %v570
  %v572 = vmul.f32 %v60, %v440
  %v573 = vadd.f32 %v571, %v572
  %v574 = vmul.f32 %v62, %v256
  %v575 = vadd.f32 %v573, %v574
  %v576 = vmul.f32 %v66, %v409
  %v577 = vadd.f32 %v575, %v576
  %v578 = vmul.f32 %v68, %v163
  %v579 = vadd.f32 %v577, %v578
  %v580 = vmul.f32 %v72, %v286
  %v581 = vadd.f32 %v579, %v580
  %v582 = vmul.f32 %v46, %v332
  %v583 = vsub.f32 %v581, %v582
  %v584 = vmul.f32 %v48, %v118
  %v585 = vsub.f32 %v583, %v584
  %v586 = vmul.f32 %v56, %v301
  %v587 = vsub.f32 %v585, %v586
  %v588 = vmul.f32 %v58, %v194
  %v589 = vsub.f32 %v587, %v588
  %v590 = vmul.f32 %v64, %v133
  %v591 = vsub.f32 %v589, %v590
  %v592 = vmul.f32 %v70, %v363
  %v593 = vsub.f32 %v591, %v592
  %v594 = vmul.f32 %v42, %v256
  %v595 = vmul.f32 %v44, %v163
  %v596 = vadd.f32 %v594, %v595
  %v597 = vmul.f32 %v52, %v286
  %v598 = vadd.f32 %v596, %v597
  %v599 = vmul.f32 %v54, %v301
  %v600 = vadd.f32 %v598, %v599
  %v601 = vmul.f32 %v56, %v87
  %v602 = vadd.f32 %v600, %v601
  %v603 = vmul.f32 %v70, %v332
  %v604 = vadd.f32 %v602, %v603
  %v605 = vmul.f32 %v46, %v363
  %v606 = vsub.f32 %v604, %v605
  %v607 = vmul.f32 %v48, %v394
  %v608 = vsub.f32 %v606, %v607
  %v609 = vmul.f32 %v50, %v118
  %v610 = vsub.f32 %v608, %v609
  %v611 = vmul.f32 %v58, %v440
  %v612 = vsub.f32 %v610, %v611
  %v613 = vmul.f32 %v60, %v194
  %v614 = vsub.f32 %v612, %v613
  %v615 = vmul.f32 %v62, %v225
  %v616 = vsub.f32 %v614, %v615
  %v617 = vmul.f32 %v64, %v409
  %v618 = vsub.f32 %v616, %v617
  %v619 = vmul.f32 %v66, %v133
  %v620 = vsub.f32 %v618, %v619
  %v621 = vmul.f32 %v68, %v148
  %v622 = vsub.f32 %v620, %v621
  %v623 = vmul.f32 %v72, %v271
  %v624 = vsub.f32 %v622, %v623
  %v625 = vmul.f32 %v42, %v271
  %v626 = vmul.f32 %v46, %v148
  %v627 = vadd.f32 %v625, %v626
  %v628 = vmul.f32 %v50, %v409
  %v629 = vadd.f32 %v627, %v628
  %v630 = vmul.f32 %v58, %v87
  %v631 = vadd.f32 %v629, %v630
  %v632 = vmul.f32 %v62, %v286
  %v633 = vadd.f32 %v631, %v632
  %v634 = vmul.f32 %v70, %v163
  %v635 = vadd.f32 %v633, %v634
  %v636 = vmul.f32 %v48, %v133
  %v637 = vsub.f32 %v635, %v636
  %v638 = vmul.f32 %v60, %v301
  %v639 = vsub.f32 %v637, %v638
  %v640 = vmul.f32 %v42, %v286
  %v641 = vmul.f32 %v46, %v163
  %v642 = vadd.f32 %v640, %v641
  %v643 = vmul.f32 %v58, %v301
  %v644 = vadd.f32 %v642, %v643
  %v645 = vmul.f32 %v60, %v87
  %v646 = vadd.f32 %v644, %v645
  %v647 = vmul.f32 %v48, %v409
  %v648 = vsub.f32 %v646, %v647
  %v649 = vmul.f32 %v50, %v133
  %v650 = vsub.f32 %v648, %v649
  %v651 = vmul.f32 %v62, %v271
  %v652 = vsub.f32 %v650, %v651
  %v653 = vmul.f32 %v70, %v148
  %v654 = vsub.f32 %v652, %v653
  %v655 = vmul.f32 %v42, %v301
  %v656 = vmul.f32 %v46, %v409
  %v657 = vadd.f32 %v655, %v656
  %v658 = vmul.f32 %v48, %v163
  %v659 = vadd.f32 %v657, %v658
  %v660 = vmul.f32 %v60, %v271
  %v661 = vadd.f32 %v659, %v660
  %v662 = vmul.f32 %v62, %v87
  %v663 = vadd.f32 %v661, %v662
  %v664 = vmul.f32 %v70, %v133
  %v665 = vadd.f32 %v663, %v664
  %v666 = vmul.f32 %v50, %v148
  %v667 = vsub.f32 %v665, %v666
  %v668 = vmul.f32 %v58, %v286
  %v669 = vsub.f32 %v667, %v668
  %v670 = vmul.f32 %v42, %v332
  %v671 = vmul.f32 %v44, %v271
  %v672 = vadd.f32 %v670, %v671
  %v673 = vmul.f32 %v48, %v194
  %v674 = vadd.f32 %v672, %v673
  %v675 = vmul.f32 %v52, %v148
  %v676 = vadd.f32 %v674, %v675
  %v677 = vmul.f32 %v56, %v409
  %v678 = vadd.f32 %v676, %v677
  %v679 = vmul.f32 %v58, %v118
  %v680 = vadd.f32 %v678, %v679
  %v681 = vmul.f32 %v62, %v363
  %v682 = vadd.f32 %v680, %v681
  %v683 = vmul.f32 %v64, %v87
  %v684 = vadd.f32 %v682, %v683
  %v685 = vmul.f32 %v68, %v286
  %v686 = vadd.f32 %v684, %v685
  %v687 = vmul.f32 %v72, %v163
  %v688 = vadd.f32 %v686, %v687
  %v689 = vmul.f32 %v46, %v225
  %v690 = vsub.f32 %v688, %v689
  %v691 = vmul.f32 %v50, %v440
  %v692 = vsub.f32 %v690, %v691
  %v693 = vmul.f32 %v54, %v133
  %v694 = vsub.f32 %v692, %v693
  %v695 = vmul.f32 %v60, %v394
  %v696 = vsub.f32 %v694, %v695
  %v697 = vmul.f32 %v66, %v301
  %v698 = vsub.f32 %v696, %v697
  %v699 = vmul.f32 %v70, %v256
  %v700 = vsub.f32 %v698, %v699
  %v701 = vmul.f32 %v42, %v363
  %v702 = vmul.f32 %v44, %v286
  %v703 = vadd.f32 %v701, %v702
  %v704 = vmul.f32 %v48, %v440
  %v705 = vadd.f32 %v703, %v704
  %v706 = vmul.f32 %v50, %v194
  %v707 = vadd.f32 %v705, %v706
  %v708 = vmul.f32 %v52, %v163
  %v709 = vadd.f32 %v707, %v708
  %v710 = vmul.f32 %v58, %v394
  %v711 = vadd.f32 %v709, %v710
  %v712 = vmul.f32 %v60, %v118
  %v713 = vadd.f32 %v711, %v712
  %v714 = vmul.f32 %v64, %v301
  %v715 = vadd.f32 %v713, %v714
  %v716 = vmul.f32 %v66, %v87
  %v717 = vadd.f32 %v715, %v716
  %v718 = vmul.f32 %v70, %v225
  %v719 = vadd.f32 %v717, %v718
  %v720 = vmul.f32 %v46, %v256
  %v721 = vsub.f32 %v719, %v720
  %v722 = vmul.f32 %v54, %v409
  %v723 = vsub.f32 %v721, %v722
  %v724 = vmul.f32 %v56, %v133
  %v725 = vsub.f32 %v723, %v724
  %v726 = vmul.f32 %v62, %v332
  %v727 = vsub.f32 %v725, %v726
  %v728 = vmul.f32 %v68, %v271
  %v729 = vsub.f32 %v727, %v728
  %v730 = vmul.f32 %v72, %v148
  %v731 = vsub.f32 %v729, %v730
  %v732 = vmul.f32 %v42, %v394
  %v733 = vmul.f32 %v44, %v301
  %v734 = vadd.f32 %v732, %v733
  %v735 = vmul.f32 %v50, %v225
  %v736 = vadd.f32 %v734, %v735
  %v737 = vmul.f32 %v52, %v409
  %v738 = vadd.f32 %v736, %v737
  %v739 = vmul.f32 %v54, %v163
  %v740 = vadd.f32 %v738, %v739
  %v741 = vmul.f32 %v60, %v332
  %v742 = vadd.f32 %v740, %v741
  %v743 = vmul.f32 %v62, %v118
  %v744 = vadd.f32 %v742, %v743
  %v745 = vmul.f32 %v66, %v271
  %v746 = vadd.f32 %v744, %v745
  %v747 = vmul.f32 %v68, %v87
  %v748 = vadd.f32 %v746, %v747
  %v749 = vmul.f32 %v72, %v133
  %v750 = vadd.f32 %v748, %v749
  %v751 = vmul.f32 %v46, %v440
  %v752 = vsub.f32 %v750, %v751
  %v753 = vmul.f32 %v48, %v256
  %v754 = vsub.f32 %v752, %v753
  %v755 = vmul.f32 %v56, %v148
  %v756 = vsub.f32 %v754, %v755
  %v757 = vmul.f32 %v58, %v363
  %v758 = vsub.f32 %v756, %v757
  %v759 = vmul.f32 %v64, %v286
  %v760 = vsub.f32 %v758, %v759
  %v761 = vmul.f32 %v70, %v194
  %v762 = vsub.f32 %v760, %v761
  %v763 = vmul.f32 %v42, %v409
  %v764 = vmul.f32 %v46, %v301
  %v765 = vadd.f32 %v763, %v764
  %v766 = vmul.f32 %v50, %v271
  %v767 = vadd.f32 %v765, %v766
  %v768 = vmul.f32 %v58, %v163
  %v769 = vadd.f32 %v767, %v768
  %v770 = vmul.f32 %v62, %v133
  %v771 = vadd.f32 %v769, %v770
  %v772 = vmul.f32 %v70, %v87
  %v773 = vadd.f32 %v771, %v772
  %v774 = vmul.f32 %v48, %v286
  %v775 = vsub.f32 %v773, %v774
  %v776 = vmul.f32 %v60, %v148
  %v777 = vsub.f32 %v775, %v776
  %v778 = vmul.f32 %v42, %v440
  %v779 = vmul.f32 %v44, %v409
  %v780 = vadd.f32 %v778, %v779
  %v781 = vmul.f32 %v48, %v363
  %v782 = vadd.f32 %v780, %v781
  %v783 = vmul.f32 %v52, %v301
  %v784 = vadd.f32 %v782, %v783
  %v785 = vmul.f32 %v56, %v271
  %v786 = vadd.f32 %v784, %v785
  %v787 = vmul.f32 %v58, %v256
  %v788 = vadd.f32 %v786, %v787
  %v789 = vmul.f32 %v62, %v194
  %v790 = vadd.f32 %v788, %v789
  %v791 = vmul.f32 %v64, %v163
  %v792 = vadd.f32 %v790, %v791
  %v793 = vmul.f32 %v68, %v133
  %v794 = vadd.f32 %v792, %v793
  %v795 = vmul.f32 %v72, %v87
  %v796 = vadd.f32 %v794, %v795
  %v797 = vmul.f32 %v46, %v394
  %v798 = vsub.f32 %v796, %v797
  %v799 = vmul.f32 %v50, %v332
  %v800 = vsub.f32 %v798, %v799
  %v801 = vmul.f32 %v54, %v286
  %v802 = vsub.f32 %v800, %v801
  %v803 = vmul.f32 %v60, %v225
  %v804 = vsub.f32 %v802, %v803
  %v805 = vmul.f32 %v66, %v148
  %v806 = vsub.f32 %v804, %v805
  %v807 = vmul.f32 %v70, %v118
  %v808 = vsub.f32 %v806, %v807
  %809 = vst [vmem:[%s2] sm:$0xff] %v455
  %s810 = scalar_lea.vmem %s2, 8
  %811 = vst [vmem:[%s810] sm:$0xff] %v486
  %s812 = scalar_lea.vmem %s2, 16
  %813 = vst [vmem:[%s812] sm:$0xff] %v501
  %s814 = scalar_lea.vmem %s2, 24
  %815 = vst [vmem:[%s814] sm:$0xff] %v516
  %s816 = scalar_lea.vmem %s2, 32
  %817 = vst [vmem:[%s816] sm:$0xff] %v531
  %s818 = scalar_lea.vmem %s2, 40
  %819 = vst [vmem:[%s818] sm:$0xff] %v562
  %s820 = scalar_lea.vmem %s2, 48
  %821 = vst [vmem:[%s820] sm:$0xff] %v593
  %s822 = scalar_lea.vmem %s2, 56
  %823 = vst [vmem:[%s822] sm:$0xff] %v624
  %s824 = scalar_lea.vmem %s2, 64
  %825 = vst [vmem:[%s824] sm:$0xff] %v639
  %s826 = scalar_lea.vmem %s2, 72
  %827 = vst [vmem:[%s826] sm:$0xff] %v654
  %s828 = scalar_lea.vmem %s2, 80
  %829 = vst [vmem:[%s828] sm:$0xff] %v669
  %s830 = scalar_lea.vmem %s2, 88
  %831 = vst [vmem:[%s830] sm:$0xff] %v700
  %s832 = scalar_lea.vmem %s2, 96
  %833 = vst [vmem:[%s832] sm:$0xff] %v731
  %s834 = scalar_lea.vmem %s2, 104
  %835 = vst [vmem:[%s834] sm:$0xff] %v762
  %s836 = scalar_lea.vmem %s2, 112
  %837 = vst [vmem:[%s836] sm:$0xff] %v777
  %s838 = scalar_lea.vmem %s2, 120
  %839 = vst [vmem:[%s838] sm:$0xff] %v808
  // Predicated region
  $region10: #{ga_versor_forward.1} parent=0 // pred_check
    _
  $region11: #{ga_versor_forward.1} parent=0 // pred_check_branch
    %841 = sbr.rel (0) target = $region13
  $region12: #{ga_versor_forward.1} parent=0 // pred_region
    _
  $region13: #{ga_versor_forward.1} parent=0 // pred_fallthru
    _
  // Predicated region
  $region14: #{ga_versor_forward.1} parent=0 // pred_check
    _
  $region15: #{ga_versor_forward.1} parent=0 // pred_check_branch
    %843 = sbr.rel (0) target = $region17
  $region16: #{ga_versor_forward.1} parent=0 // pred_region
    _
  $region17: #{ga_versor_forward.1} parent=0 // pred_fallthru
    _

</llo_original>
